<compile_context>
chip_gen: v6e
topology: v6e:2x2x1
jax: 0.10.0
libtpu: 0.0.40
codegen_flags: <defaults>
</compile_context>

<pallas_src>
import functools
import math

import jax
import jax.numpy as jnp
from jax.experimental import pallas as pl
from jax.experimental.pallas import tpu as pltpu

_BN_EPS = 1e-5


# ----------------------------------------------------------------------------
# Kernel
# ----------------------------------------------------------------------------
def _inconv_kernel(x_ref, w1_ref, b1_ref, w2_ref, b2_ref, selA_ref, selB_ref,
                   m1_ref, m2_ref, m3_ref, o_ref, s1_ref, s2_ref,
                   *, H, W, B_TILE):
    # Per grid step (B_TILE batch elements):
    #   x_ref   : (B_TILE, Cin, H*W)   flat NCHW images, spatial in lanes (f32)
    #   w1_ref  : (Cmid, 25*Cin)       5x5 taps flattened, BN scale folded (bf16)
    #   b1_ref  : (Cmid, 1)            folded BN bias (f32)
    #   w2_ref  : (Cout, 9*Cmid)       3x3 taps flattened, BN scale folded (bf16)
    #   b2_ref  : (Cout, 1)
    #   selA_ref: (H*W,   H*W//4)      0/1 even-position subsample matrix (bf16)
    #   selB_ref: (H*W//4, H*W//16)
    #   m1_ref  : (25, 1, H*W)         precomputed boundary masks, t = ky*5+kx (f32)
    #   m2_ref  : (9, 1, H*W)
    #   m3_ref  : (9, 1, H*W//4)
    #   o_ref   : (B_TILE, Cout, H*W//16)
    #   s1_ref  : (25*Cin, H*W)  VMEM scratch: stage-1 shifted tap stack (f32)
    #   s2_ref  : (9*Cmid, H*W)  VMEM scratch: stage-2 shifted tap stack (f32)
    W2 = W // 2
    c_in = x_ref.shape[1]
    c_mid = w1_ref.shape[0]

    # Hoisted (loaded once per grid step, reused for all B_TILE images).
    w1 = w1_ref[...]
    w2 = w2_ref[...]
    b1 = b1_ref[...]
    b2 = b2_ref[...]
    selA = selA_ref[...]
    selB = selB_ref[...]

    for b in range(B_TILE):
        x = x_ref[b]                                          # (Cin, H*W) f32

        # ---- stage 1: 5x5 "same" conv (BN scale folded) + bias + ReLU ------
        # Build the (25*Cin, HW) shifted/masked tap stack, then ONE K=25*Cin
        # matmul.  The circular wrap of the lane roll only lands on positions
        # that the precomputed mask zeroes out.
        t = 0
        for dy in range(-2, 3):
            for dx in range(-2, 3):
                d = dy * W + dx
                v = x if d == 0 else jnp.roll(x, -d, axis=1)
                if dy == 0 and dx == 0:
                    piece = v                                 # center: mask == 1
                else:
                    piece = v * m1_ref[t]                     # (Cin, HW) * (1, HW)
                s1_ref[pl.ds(t * c_in, c_in), :] = piece
                t += 1
        y1 = jnp.dot(w1, s1_ref[...].astype(jnp.bfloat16),
                     preferred_element_type=jnp.float32)      # (Cmid, HW)
        y1 = jnp.maximum(y1 + b1, 0.0)

        # ---- stage 2: 3x3 stride-2 conv + bias + ReLU -----------------------
        # Evaluated at stride 1 and subsampled at the even (y, x) positions on
        # the MXU with the selA 0/1 matrix (demo-size only; see TODO at top).
        t = 0
        for dy in range(-1, 2):
            for dx in range(-1, 2):
                d = dy * W + dx
                v = y1 if d == 0 else jnp.roll(y1, -d, axis=1)
                if dy == 0 and dx == 0:
                    piece = v
                else:
                    piece = v * m2_ref[t]
                s2_ref[pl.ds(t * c_mid, c_mid), :] = piece
                t += 1
        z = jnp.dot(w2, s2_ref[...].astype(jnp.bfloat16),
                    preferred_element_type=jnp.float32)       # (Cout, HW)
        z = jnp.maximum(z + b2, 0.0)
        z2 = jnp.dot(z.astype(jnp.bfloat16), selA,
                     preferred_element_type=jnp.float32)      # (Cout, HW/4)

        # ---- stage 3: 3x3 stride-2 max-pool (pad 1) -------------------------
        # z2 is post-ReLU (>= 0) so the masked 0-fill is equivalent to the
        # implicit -inf padding of MaxPool2d (the window center is always valid).
        m = z2
        t = 0
        for dy in range(-1, 2):
            for dx in range(-1, 2):
                if not (dy == 0 and dx == 0):
                    d = dy * W2 + dx
                    m = jnp.maximum(m, jnp.roll(z2, -d, axis=1) * m3_ref[t])
                t += 1
        y3 = jnp.dot(m.astype(jnp.bfloat16), selB,
                     preferred_element_type=jnp.float32)      # (Cout, HW/16)

        o_ref[b] = y3.astype(o_ref.dtype)


# ----------------------------------------------------------------------------
# Wrapper: weight / BN / mask prep (eval-mode fold) + pallas_call
# ----------------------------------------------------------------------------
def _fold_bn(p, eps=_BN_EPS):
    scale = p["gamma"] / jnp.sqrt(p["var"] + eps)
    bias = (p["b"] - p["mean"]) * scale + p["beta"]
    return scale, bias


def _flat_weights(w_oihw, scale):
    # OIHW (*scale per O) -> (O, Kh*Kw*I) so column index == t*Cin + c with
    # t = ky*kw + kx, matching the in-kernel tap-stack row order.
    o, i, kh, kw = w_oihw.shape
    w = w_oihw * scale[:, None, None, None]
    return jnp.transpose(w, (0, 2, 3, 1)).reshape(o, kh * kw * i)


def _subsample_matrix(h, w, dtype):
    # (h*w, (h//2)*(w//2)) 0/1 matrix selecting the even (y, x) positions.
    ho, wo = h // 2, w // 2
    j = jnp.arange(ho * wo)
    src = 2 * (j // wo) * w + 2 * (j % wo)
    return (jnp.arange(h * w)[:, None] == src[None, :]).astype(dtype)


def _shift_masks(h, w, radius):
    # (k*k, 1, h*w) boundary masks: mask[t, 0, y*w + x] = 1 iff (y+dy, x+dx)
    # is inside the image, t = (dy+radius)*(2r+1) + (dx+radius).
    idx = jnp.arange(h * w)
    xc, yc = idx % w, idx // w
    rows = []
    for dy in range(-radius, radius + 1):
        for dx in range(-radius, radius + 1):
            ok = ((xc + dx >= 0) & (xc + dx < w) &
                  (yc + dy >= 0) & (yc + dy < h))
            rows.append(ok.astype(jnp.float32))
    return jnp.stack(rows)[:, None, :]


def inconv_forward(x_nchw, p1, p2, *, b_tile=1):
    """inconv / double_conv_in forward (eval-mode BN).  NCHW in, NCHW out."""
    N, c_in, H, W = x_nchw.shape
    assert H % 4 == 0 and W % 4 == 0, "demo kernel assumes H, W divisible by 4"
    assert N % b_tile == 0
    c_mid = p1["w"].shape[0]
    c_out = p2["w"].shape[0]
    HW = H * W
    HW2 = HW // 4
    HW4 = HW // 16

    s1, bias1 = _fold_bn(p1)
    s2, bias2 = _fold_bn(p2)
    w1f = _flat_weights(p1["w"], s1).astype(jnp.bfloat16)      # (c_mid, 25*c_in)
    w2f = _flat_weights(p2["w"], s2).astype(jnp.bfloat16)      # (c_out, 9*c_mid)
    b1 = bias1[:, None].astype(jnp.float32)                    # (c_mid, 1)
    b2 = bias2[:, None].astype(jnp.float32)                    # (c_out, 1)
    selA = _subsample_matrix(H, W, jnp.bfloat16)               # (HW,   HW//4)
    selB = _subsample_matrix(H // 2, W // 2, jnp.bfloat16)     # (HW//4, HW//16)
    m1 = _shift_masks(H, W, 2)                                 # (25, 1, HW)
    m2 = _shift_masks(H, W, 1)                                 # (9,  1, HW)
    m3 = _shift_masks(H // 2, W // 2, 1)                       # (9,  1, HW//4)

    x_flat = x_nchw.reshape(N, c_in, HW)                       # free: channel-major

    # VMEM working set (double-buffered blocks + scratch), with headroom.
    work = (2 * b_tile * c_in * HW * 4 + 2 * b_tile * c_out * HW4 * 4
            + 2 * (c_mid * 25 * c_in + c_out * 9 * c_mid) * 2
            + 2 * (HW * HW2 + HW2 * HW4) * 2
            + 2 * (25 * HW + 9 * HW + 9 * HW2) * 4
            + 2 * (c_mid + c_out) * 4
            + (25 * c_in + 9 * c_mid) * HW * 4)
    vmem_limit = int(min(100 * 2**20, max(16 * 2**20, 4 * work)))

    kernel = functools.partial(_inconv_kernel, H=H, W=W, B_TILE=b_tile)
    out = pl.pallas_call(
        kernel,
        out_shape=jax.ShapeDtypeStruct((N, c_out, HW4), x_nchw.dtype),
        grid=(N // b_tile,),
        in_specs=[
            pl.BlockSpec((b_tile, c_in, HW), lambda n: (n, 0, 0)),
            pl.BlockSpec((c_mid, 25 * c_in), lambda n: (0, 0)),
            pl.BlockSpec((c_mid, 1), lambda n: (0, 0)),
            pl.BlockSpec((c_out, 9 * c_mid), lambda n: (0, 0)),
            pl.BlockSpec((c_out, 1), lambda n: (0, 0)),
            pl.BlockSpec((HW, HW2), lambda n: (0, 0)),
            pl.BlockSpec((HW2, HW4), lambda n: (0, 0)),
            pl.BlockSpec((25, 1, HW), lambda n: (0, 0, 0)),
            pl.BlockSpec((9, 1, HW), lambda n: (0, 0, 0)),
            pl.BlockSpec((9, 1, HW2), lambda n: (0, 0, 0)),
        ],
        out_specs=pl.BlockSpec((b_tile, c_out, HW4), lambda n: (n, 0, 0)),
        scratch_shapes=[
            pltpu.VMEM((25 * c_in, HW), jnp.float32),   # stage-1 tap stack
            pltpu.VMEM((9 * c_mid, HW), jnp.float32),   # stage-2 tap stack
        ],
        compiler_params=pltpu.CompilerParams(
            dimension_semantics=("parallel",),
            vmem_limit_bytes=vmem_limit),
    )(x_flat, w1f, b1, w2f, b2, selA, selB, m1, m2, m3)
    return out.reshape(N, c_out, H // 4, W // 4)


# ----------------------------------------------------------------------------
# Pure-JAX reference (eval-mode BN) for verification.
# ----------------------------------------------------------------------------
def _ref_inconv(x, p1, p2, eps=_BN_EPS):
    def cbr(x, p, stride, pad):
        y = jax.lax.conv_general_dilated(
            x, p["w"], window_strides=(stride, stride),
            padding=((pad, pad), (pad, pad)),
            dimension_numbers=("NCHW", "OIHW", "NCHW"),
            precision=jax.lax.Precision.HIGHEST)
        y = y + p["b"][None, :, None, None]
        y = (y - p["mean"][None, :, None, None]) / jnp.sqrt(
            p["var"][None, :, None, None] + eps)
        y = y * p["gamma"][None, :, None, None] + p["beta"][None, :, None, None]
        return jnp.maximum(y, 0.0)

    y = cbr(x, p1, 1, 2)          # Conv2d(in, in, 5, padding=2) + BN + ReLU
    y = cbr(y, p2, 2, 1)          # Conv2d(in, out, 3, padding=1, stride=2) + BN + ReLU
    return jax.lax.reduce_window(  # MaxPool2d(kernel_size=3, stride=2, padding=1)
        y, -jnp.inf, jax.lax.max,
        window_dimensions=(1, 1, 3, 3), window_strides=(1, 1, 2, 2),
        padding=((0, 0), (0, 0), (1, 1), (1, 1)))


# ----------------------------------------------------------------------------
if __name__ == "__main__":
    key = jax.random.PRNGKey(0)
    ks = jax.random.split(key, 3)

    N, in_ch, out_ch, H, W = 2, 4, 8, 16, 16

    def make_conv_bn(k, cin, cout, ksize):
        kk = jax.random.split(k, 6)
        return dict(
            w=jax.random.normal(kk[0], (cout, cin, ksize, ksize), jnp.float32) * 0.1,
            b=jax.random.normal(kk[1], (cout,), jnp.float32) * 0.1,
            gamma=1.0 + 0.1 * jax.random.normal(kk[2], (cout,), jnp.float32),
            beta=0.1 * jax.random.normal(kk[3], (cout,), jnp.float32),
            mean=0.1 * jax.random.normal(kk[4], (cout,), jnp.float32),
            var=jnp.abs(jax.random.normal(kk[5], (cout,), jnp.float32)) + 0.5,
        )

    x = jax.random.normal(ks[0], (N, in_ch, H, W), jnp.float32)
    p1 = make_conv_bn(ks[1], in_ch, in_ch, 5)    # Conv2d(in_ch, in_ch, 5, padding=2)
    p2 = make_conv_bn(ks[2], in_ch, out_ch, 3)   # Conv2d(in_ch, out_ch, 3, p=1, s=2)

    out = jax.block_until_ready(inconv_forward(x, p1, p2))
    ref = jax.block_until_ready(_ref_inconv(x, p1, p2))

    assert out.shape == (N, out_ch, H // 4, W // 4), out.shape
    # Tolerance accounts for the bf16 MXU operands (f32 accumulation); the f32
    # reference uses Precision.HIGHEST.
    err = float(jnp.max(jnp.abs(out - ref)))
    assert jnp.allclose(out, ref, atol=2e-2, rtol=2e-2), err

    print("KERNEL_OK")
</pallas_src>

<mosaic_0001>
module attributes {stable_mosaic.version = 11 : i64} {
  func.func @_inconv_kernel(%arg0: i32, %arg1: memref<1x4x256xf32, #tpu.memory_space<vmem>>, %arg2: memref<4x100xbf16, #tpu.memory_space<vmem>>, %arg3: memref<4x1xf32, #tpu.memory_space<vmem>>, %arg4: memref<8x36xbf16, #tpu.memory_space<vmem>>, %arg5: memref<8x1xf32, #tpu.memory_space<vmem>>, %arg6: memref<256x64xbf16, #tpu.memory_space<vmem>>, %arg7: memref<64x16xbf16, #tpu.memory_space<vmem>>, %arg8: memref<25x1x256xf32, #tpu.memory_space<vmem>>, %arg9: memref<9x1x256xf32, #tpu.memory_space<vmem>>, %arg10: memref<9x1x64xf32, #tpu.memory_space<vmem>>, %arg11: memref<1x8x16xf32, #tpu.memory_space<vmem>>, %arg12: memref<100x256xf32, #tpu.memory_space<vmem>>, %arg13: memref<36x256xf32, #tpu.memory_space<vmem>>) attributes {dimension_semantics = [#tpu.dimension_semantics<parallel>], iteration_bounds = array<i64: 2>, scalar_prefetch = 0 : i64, scratch_operands = 2 : i64, tpu.core_type = #tpu.core_type<tc>, window_params = [{transform_indices = @transform_0, window_bounds = array<i64: 1, 4, 256>}, {pipeline_mode = #tpu.pipeline_mode<synchronous>, transform_indices = @transform_1, window_bounds = array<i64: 4, 100>}, {pipeline_mode = #tpu.pipeline_mode<synchronous>, transform_indices = @transform_2, window_bounds = array<i64: 4, 1>}, {pipeline_mode = #tpu.pipeline_mode<synchronous>, transform_indices = @transform_3, window_bounds = array<i64: 8, 36>}, {pipeline_mode = #tpu.pipeline_mode<synchronous>, transform_indices = @transform_4, window_bounds = array<i64: 8, 1>}, {pipeline_mode = #tpu.pipeline_mode<synchronous>, transform_indices = @transform_5, window_bounds = array<i64: 256, 64>}, {pipeline_mode = #tpu.pipeline_mode<synchronous>, transform_indices = @transform_6, window_bounds = array<i64: 64, 16>}, {pipeline_mode = #tpu.pipeline_mode<synchronous>, transform_indices = @transform_7, window_bounds = array<i64: 25, 1, 256>}, {pipeline_mode = #tpu.pipeline_mode<synchronous>, transform_indices = @transform_8, window_bounds = array<i64: 9, 1, 256>}, {pipeline_mode = #tpu.pipeline_mode<synchronous>, transform_indices = @transform_9, window_bounds = array<i64: 9, 1, 64>}, {transform_indices = @transform_10, window_bounds = array<i64: 1, 8, 16>}]} {
    %c0 = arith.constant 0 : index
    %c0_0 = arith.constant 0 : index
    %0 = vector.load %arg2[%c0, %c0_0] : memref<4x100xbf16, #tpu.memory_space<vmem>>, vector<4x100xbf16>
    %c0_1 = arith.constant 0 : index
    %c0_2 = arith.constant 0 : index
    %1 = vector.load %arg4[%c0_1, %c0_2] : memref<8x36xbf16, #tpu.memory_space<vmem>>, vector<8x36xbf16>
    %c0_3 = arith.constant 0 : index
    %c0_4 = arith.constant 0 : index
    %2 = vector.load %arg3[%c0_3, %c0_4] : memref<4x1xf32, #tpu.memory_space<vmem>>, vector<4x1xf32>
    %c0_5 = arith.constant 0 : index
    %c0_6 = arith.constant 0 : index
    %3 = vector.load %arg5[%c0_5, %c0_6] : memref<8x1xf32, #tpu.memory_space<vmem>>, vector<8x1xf32>
    %c0_7 = arith.constant 0 : index
    %c0_8 = arith.constant 0 : index
    %4 = vector.load %arg6[%c0_7, %c0_8] : memref<256x64xbf16, #tpu.memory_space<vmem>>, vector<256x64xbf16>
    %c0_9 = arith.constant 0 : index
    %c0_10 = arith.constant 0 : index
    %5 = vector.load %arg7[%c0_9, %c0_10] : memref<64x16xbf16, #tpu.memory_space<vmem>>, vector<64x16xbf16>
    %c0_11 = arith.constant 0 : index
    %c0_12 = arith.constant 0 : index
    %c0_13 = arith.constant 0 : index
    %6 = vector.load %arg1[%c0_11, %c0_12, %c0_13] : memref<1x4x256xf32, #tpu.memory_space<vmem>>, vector<1x4x256xf32>
    %7 = vector.shape_cast %6 : vector<1x4x256xf32> to vector<4x256xf32>
    %8 = vector.extract_strided_slice %7 {offsets = [0, 222], sizes = [4, 34], strides = [1, 1]} : vector<4x256xf32> to vector<4x34xf32>
    %9 = vector.extract_strided_slice %7 {offsets = [0, 0], sizes = [4, 222], strides = [1, 1]} : vector<4x256xf32> to vector<4x222xf32>
    %10 = tpu.concatenate %8, %9 in 1 : vector<4x34xf32>, vector<4x222xf32> -> vector<4x256xf32>
    %c0_14 = arith.constant 0 : index
    %c0_15 = arith.constant 0 : index
    %c0_16 = arith.constant 0 : index
    %11 = vector.load %arg8[%c0_14, %c0_15, %c0_16] : memref<25x1x256xf32, #tpu.memory_space<vmem>>, vector<1x1x256xf32>
    %12 = vector.shape_cast %11 : vector<1x1x256xf32> to vector<1x256xf32>
    %13 = vector.broadcast %12 : vector<1x256xf32> to vector<4x256xf32>
    %14 = arith.mulf %10, %13 : vector<4x256xf32>
    %c0_17 = arith.constant 0 : index
    %c0_18 = arith.constant 0 : index
    %15 = vector.load %arg12[%c0_17, %c0_18] : memref<100x256xf32, #tpu.memory_space<vmem>>, vector<4x256xf32>
    tpu.vector_store %arg12[%c0_17, %c0_18], %14 {strides = array<i32>} : memref<100x256xf32, #tpu.memory_space<vmem>>, vector<4x256xf32>,
    %16 = vector.extract_strided_slice %7 {offsets = [0, 223], sizes = [4, 33], strides = [1, 1]} : vector<4x256xf32> to vector<4x33xf32>
    %17 = vector.extract_strided_slice %7 {offsets = [0, 0], sizes = [4, 223], strides = [1, 1]} : vector<4x256xf32> to vector<4x223xf32>
    %18 = tpu.concatenate %16, %17 in 1 : vector<4x33xf32>, vector<4x223xf32> -> vector<4x256xf32>
    %c1 = arith.constant 1 : index
    %c0_19 = arith.constant 0 : index
    %c0_20 = arith.constant 0 : index
    %19 = vector.load %arg8[%c1, %c0_19, %c0_20] : memref<25x1x256xf32, #tpu.memory_space<vmem>>, vector<1x1x256xf32>
    %20 = vector.shape_cast %19 : vector<1x1x256xf32> to vector<1x256xf32>
    %21 = vector.broadcast %20 : vector<1x256xf32> to vector<4x256xf32>
    %22 = arith.mulf %18, %21 : vector<4x256xf32>
    %c4 = arith.constant 4 : index
    %c0_21 = arith.constant 0 : index
    %23 = vector.load %arg12[%c4, %c0_21] : memref<100x256xf32, #tpu.memory_space<vmem>>, vector<4x256xf32>
    tpu.vector_store %arg12[%c4, %c0_21], %22 {strides = array<i32>} : memref<100x256xf32, #tpu.memory_space<vmem>>, vector<4x256xf32>,
    %24 = vector.extract_strided_slice %7 {offsets = [0, 224], sizes = [4, 32], strides = [1, 1]} : vector<4x256xf32> to vector<4x32xf32>
    %25 = vector.extract_strided_slice %7 {offsets = [0, 0], sizes = [4, 224], strides = [1, 1]} : vector<4x256xf32> to vector<4x224xf32>
    %26 = tpu.concatenate %24, %25 in 1 : vector<4x32xf32>, vector<4x224xf32> -> vector<4x256xf32>
    %c2 = arith.constant 2 : index
    %c0_22 = arith.constant 0 : index
    %c0_23 = arith.constant 0 : index
    %27 = vector.load %arg8[%c2, %c0_22, %c0_23] : memref<25x1x256xf32, #tpu.memory_space<vmem>>, vector<1x1x256xf32>
    %28 = vector.shape_cast %27 : vector<1x1x256xf32> to vector<1x256xf32>
    %29 = vector.broadcast %28 : vector<1x256xf32> to vector<4x256xf32>
    %30 = arith.mulf %26, %29 : vector<4x256xf32>
    %c8 = arith.constant 8 : index
    %c0_24 = arith.constant 0 : index
    %31 = vector.load %arg12[%c8, %c0_24] : memref<100x256xf32, #tpu.memory_space<vmem>>, vector<4x256xf32>
    tpu.vector_store %arg12[%c8, %c0_24], %30 {strides = array<i32>} : memref<100x256xf32, #tpu.memory_space<vmem>>, vector<4x256xf32>,
    %32 = vector.extract_strided_slice %7 {offsets = [0, 225], sizes = [4, 31], strides = [1, 1]} : vector<4x256xf32> to vector<4x31xf32>
    %33 = vector.extract_strided_slice %7 {offsets = [0, 0], sizes = [4, 225], strides = [1, 1]} : vector<4x256xf32> to vector<4x225xf32>
    %34 = tpu.concatenate %32, %33 in 1 : vector<4x31xf32>, vector<4x225xf32> -> vector<4x256xf32>
    %c3 = arith.constant 3 : index
    %c0_25 = arith.constant 0 : index
    %c0_26 = arith.constant 0 : index
    %35 = vector.load %arg8[%c3, %c0_25, %c0_26] : memref<25x1x256xf32, #tpu.memory_space<vmem>>, vector<1x1x256xf32>
    %36 = vector.shape_cast %35 : vector<1x1x256xf32> to vector<1x256xf32>
    %37 = vector.broadcast %36 : vector<1x256xf32> to vector<4x256xf32>
    %38 = arith.mulf %34, %37 : vector<4x256xf32>
    %c12 = arith.constant 12 : index
    %c0_27 = arith.constant 0 : index
    %39 = vector.load %arg12[%c12, %c0_27] : memref<100x256xf32, #tpu.memory_space<vmem>>, vector<4x256xf32>
    tpu.vector_store %arg12[%c12, %c0_27], %38 {strides = array<i32>} : memref<100x256xf32, #tpu.memory_space<vmem>>, vector<4x256xf32>,
    %40 = vector.extract_strided_slice %7 {offsets = [0, 226], sizes = [4, 30], strides = [1, 1]} : vector<4x256xf32> to vector<4x30xf32>
    %41 = vector.extract_strided_slice %7 {offsets = [0, 0], sizes = [4, 226], strides = [1, 1]} : vector<4x256xf32> to vector<4x226xf32>
    %42 = tpu.concatenate %40, %41 in 1 : vector<4x30xf32>, vector<4x226xf32> -> vector<4x256xf32>
    %c4_28 = arith.constant 4 : index
    %c0_29 = arith.constant 0 : index
    %c0_30 = arith.constant 0 : index
    %43 = vector.load %arg8[%c4_28, %c0_29, %c0_30] : memref<25x1x256xf32, #tpu.memory_space<vmem>>, vector<1x1x256xf32>
    %44 = vector.shape_cast %43 : vector<1x1x256xf32> to vector<1x256xf32>
    %45 = vector.broadcast %44 : vector<1x256xf32> to vector<4x256xf32>
    %46 = arith.mulf %42, %45 : vector<4x256xf32>
    %c16 = arith.constant 16 : index
    %c0_31 = arith.constant 0 : index
    %47 = vector.load %arg12[%c16, %c0_31] : memref<100x256xf32, #tpu.memory_space<vmem>>, vector<4x256xf32>
    tpu.vector_store %arg12[%c16, %c0_31], %46 {strides = array<i32>} : memref<100x256xf32, #tpu.memory_space<vmem>>, vector<4x256xf32>,
    %48 = vector.extract_strided_slice %7 {offsets = [0, 238], sizes = [4, 18], strides = [1, 1]} : vector<4x256xf32> to vector<4x18xf32>
    %49 = vector.extract_strided_slice %7 {offsets = [0, 0], sizes = [4, 238], strides = [1, 1]} : vector<4x256xf32> to vector<4x238xf32>
    %50 = tpu.concatenate %48, %49 in 1 : vector<4x18xf32>, vector<4x238xf32> -> vector<4x256xf32>
    %c5 = arith.constant 5 : index
    %c0_32 = arith.constant 0 : index
    %c0_33 = arith.constant 0 : index
    %51 = vector.load %arg8[%c5, %c0_32, %c0_33] : memref<25x1x256xf32, #tpu.memory_space<vmem>>, vector<1x1x256xf32>
    %52 = vector.shape_cast %51 : vector<1x1x256xf32> to vector<1x256xf32>
    %53 = vector.broadcast %52 : vector<1x256xf32> to vector<4x256xf32>
    %54 = arith.mulf %50, %53 : vector<4x256xf32>
    %c20 = arith.constant 20 : index
    %c0_34 = arith.constant 0 : index
    %55 = vector.load %arg12[%c20, %c0_34] : memref<100x256xf32, #tpu.memory_space<vmem>>, vector<4x256xf32>
    tpu.vector_store %arg12[%c20, %c0_34], %54 {strides = array<i32>} : memref<100x256xf32, #tpu.memory_space<vmem>>, vector<4x256xf32>,
    %56 = vector.extract_strided_slice %7 {offsets = [0, 239], sizes = [4, 17], strides = [1, 1]} : vector<4x256xf32> to vector<4x17xf32>
    %57 = vector.extract_strided_slice %7 {offsets = [0, 0], sizes = [4, 239], strides = [1, 1]} : vector<4x256xf32> to vector<4x239xf32>
    %58 = tpu.concatenate %56, %57 in 1 : vector<4x17xf32>, vector<4x239xf32> -> vector<4x256xf32>
    %c6 = arith.constant 6 : index
    %c0_35 = arith.constant 0 : index
    %c0_36 = arith.constant 0 : index
    %59 = vector.load %arg8[%c6, %c0_35, %c0_36] : memref<25x1x256xf32, #tpu.memory_space<vmem>>, vector<1x1x256xf32>
    %60 = vector.shape_cast %59 : vector<1x1x256xf32> to vector<1x256xf32>
    %61 = vector.broadcast %60 : vector<1x256xf32> to vector<4x256xf32>
    %62 = arith.mulf %58, %61 : vector<4x256xf32>
    %c24 = arith.constant 24 : index
    %c0_37 = arith.constant 0 : index
    %63 = vector.load %arg12[%c24, %c0_37] : memref<100x256xf32, #tpu.memory_space<vmem>>, vector<4x256xf32>
    tpu.vector_store %arg12[%c24, %c0_37], %62 {strides = array<i32>} : memref<100x256xf32, #tpu.memory_space<vmem>>, vector<4x256xf32>,
    %64 = vector.extract_strided_slice %7 {offsets = [0, 240], sizes = [4, 16], strides = [1, 1]} : vector<4x256xf32> to vector<4x16xf32>
    %65 = vector.extract_strided_slice %7 {offsets = [0, 0], sizes = [4, 240], strides = [1, 1]} : vector<4x256xf32> to vector<4x240xf32>
    %66 = tpu.concatenate %64, %65 in 1 : vector<4x16xf32>, vector<4x240xf32> -> vector<4x256xf32>
    %c7 = arith.constant 7 : index
    %c0_38 = arith.constant 0 : index
    %c0_39 = arith.constant 0 : index
    %67 = vector.load %arg8[%c7, %c0_38, %c0_39] : memref<25x1x256xf32, #tpu.memory_space<vmem>>, vector<1x1x256xf32>
    %68 = vector.shape_cast %67 : vector<1x1x256xf32> to vector<1x256xf32>
    %69 = vector.broadcast %68 : vector<1x256xf32> to vector<4x256xf32>
    %70 = arith.mulf %66, %69 : vector<4x256xf32>
    %c28 = arith.constant 28 : index
    %c0_40 = arith.constant 0 : index
    %71 = vector.load %arg12[%c28, %c0_40] : memref<100x256xf32, #tpu.memory_space<vmem>>, vector<4x256xf32>
    tpu.vector_store %arg12[%c28, %c0_40], %70 {strides = array<i32>} : memref<100x256xf32, #tpu.memory_space<vmem>>, vector<4x256xf32>,
    %72 = vector.extract_strided_slice %7 {offsets = [0, 241], sizes = [4, 15], strides = [1, 1]} : vector<4x256xf32> to vector<4x15xf32>
    %73 = vector.extract_strided_slice %7 {offsets = [0, 0], sizes = [4, 241], strides = [1, 1]} : vector<4x256xf32> to vector<4x241xf32>
    %74 = tpu.concatenate %72, %73 in 1 : vector<4x15xf32>, vector<4x241xf32> -> vector<4x256xf32>
    %c8_41 = arith.constant 8 : index
    %c0_42 = arith.constant 0 : index
    %c0_43 = arith.constant 0 : index
    %75 = vector.load %arg8[%c8_41, %c0_42, %c0_43] : memref<25x1x256xf32, #tpu.memory_space<vmem>>, vector<1x1x256xf32>
    %76 = vector.shape_cast %75 : vector<1x1x256xf32> to vector<1x256xf32>
    %77 = vector.broadcast %76 : vector<1x256xf32> to vector<4x256xf32>
    %78 = arith.mulf %74, %77 : vector<4x256xf32>
    %c32 = arith.constant 32 : index
    %c0_44 = arith.constant 0 : index
    %79 = vector.load %arg12[%c32, %c0_44] : memref<100x256xf32, #tpu.memory_space<vmem>>, vector<4x256xf32>
    tpu.vector_store %arg12[%c32, %c0_44], %78 {strides = array<i32>} : memref<100x256xf32, #tpu.memory_space<vmem>>, vector<4x256xf32>,
    %80 = vector.extract_strided_slice %7 {offsets = [0, 242], sizes = [4, 14], strides = [1, 1]} : vector<4x256xf32> to vector<4x14xf32>
    %81 = vector.extract_strided_slice %7 {offsets = [0, 0], sizes = [4, 242], strides = [1, 1]} : vector<4x256xf32> to vector<4x242xf32>
    %82 = tpu.concatenate %80, %81 in 1 : vector<4x14xf32>, vector<4x242xf32> -> vector<4x256xf32>
    %c9 = arith.constant 9 : index
    %c0_45 = arith.constant 0 : index
    %c0_46 = arith.constant 0 : index
    %83 = vector.load %arg8[%c9, %c0_45, %c0_46] : memref<25x1x256xf32, #tpu.memory_space<vmem>>, vector<1x1x256xf32>
    %84 = vector.shape_cast %83 : vector<1x1x256xf32> to vector<1x256xf32>
    %85 = vector.broadcast %84 : vector<1x256xf32> to vector<4x256xf32>
    %86 = arith.mulf %82, %85 : vector<4x256xf32>
    %c36 = arith.constant 36 : index
    %c0_47 = arith.constant 0 : index
    %87 = vector.load %arg12[%c36, %c0_47] : memref<100x256xf32, #tpu.memory_space<vmem>>, vector<4x256xf32>
    tpu.vector_store %arg12[%c36, %c0_47], %86 {strides = array<i32>} : memref<100x256xf32, #tpu.memory_space<vmem>>, vector<4x256xf32>,
    %88 = vector.extract_strided_slice %7 {offsets = [0, 254], sizes = [4, 2], strides = [1, 1]} : vector<4x256xf32> to vector<4x2xf32>
    %89 = vector.extract_strided_slice %7 {offsets = [0, 0], sizes = [4, 254], strides = [1, 1]} : vector<4x256xf32> to vector<4x254xf32>
    %90 = tpu.concatenate %88, %89 in 1 : vector<4x2xf32>, vector<4x254xf32> -> vector<4x256xf32>
    %c10 = arith.constant 10 : index
    %c0_48 = arith.constant 0 : index
    %c0_49 = arith.constant 0 : index
    %91 = vector.load %arg8[%c10, %c0_48, %c0_49] : memref<25x1x256xf32, #tpu.memory_space<vmem>>, vector<1x1x256xf32>
    %92 = vector.shape_cast %91 : vector<1x1x256xf32> to vector<1x256xf32>
    %93 = vector.broadcast %92 : vector<1x256xf32> to vector<4x256xf32>
    %94 = arith.mulf %90, %93 : vector<4x256xf32>
    %c40 = arith.constant 40 : index
    %c0_50 = arith.constant 0 : index
    %95 = vector.load %arg12[%c40, %c0_50] : memref<100x256xf32, #tpu.memory_space<vmem>>, vector<4x256xf32>
    tpu.vector_store %arg12[%c40, %c0_50], %94 {strides = array<i32>} : memref<100x256xf32, #tpu.memory_space<vmem>>, vector<4x256xf32>,
    %96 = vector.extract_strided_slice %7 {offsets = [0, 255], sizes = [4, 1], strides = [1, 1]} : vector<4x256xf32> to vector<4x1xf32>
    %97 = vector.extract_strided_slice %7 {offsets = [0, 0], sizes = [4, 255], strides = [1, 1]} : vector<4x256xf32> to vector<4x255xf32>
    %98 = tpu.concatenate %96, %97 in 1 : vector<4x1xf32>, vector<4x255xf32> -> vector<4x256xf32>
    %c11 = arith.constant 11 : index
    %c0_51 = arith.constant 0 : index
    %c0_52 = arith.constant 0 : index
    %99 = vector.load %arg8[%c11, %c0_51, %c0_52] : memref<25x1x256xf32, #tpu.memory_space<vmem>>, vector<1x1x256xf32>
    %100 = vector.shape_cast %99 : vector<1x1x256xf32> to vector<1x256xf32>
    %101 = vector.broadcast %100 : vector<1x256xf32> to vector<4x256xf32>
    %102 = arith.mulf %98, %101 : vector<4x256xf32>
    %c44 = arith.constant 44 : index
    %c0_53 = arith.constant 0 : index
    %103 = vector.load %arg12[%c44, %c0_53] : memref<100x256xf32, #tpu.memory_space<vmem>>, vector<4x256xf32>
    tpu.vector_store %arg12[%c44, %c0_53], %102 {strides = array<i32>} : memref<100x256xf32, #tpu.memory_space<vmem>>, vector<4x256xf32>,
    %c48 = arith.constant 48 : index
    %c0_54 = arith.constant 0 : index
    %104 = vector.load %arg12[%c48, %c0_54] : memref<100x256xf32, #tpu.memory_space<vmem>>, vector<4x256xf32>
    tpu.vector_store %arg12[%c48, %c0_54], %7 {strides = array<i32>} : memref<100x256xf32, #tpu.memory_space<vmem>>, vector<4x256xf32>,
    %105 = vector.extract_strided_slice %7 {offsets = [0, 1], sizes = [4, 255], strides = [1, 1]} : vector<4x256xf32> to vector<4x255xf32>
    %106 = vector.extract_strided_slice %7 {offsets = [0, 0], sizes = [4, 1], strides = [1, 1]} : vector<4x256xf32> to vector<4x1xf32>
    %107 = tpu.concatenate %105, %106 in 1 : vector<4x255xf32>, vector<4x1xf32> -> vector<4x256xf32>
    %c13 = arith.constant 13 : index
    %c0_55 = arith.constant 0 : index
    %c0_56 = arith.constant 0 : index
    %108 = vector.load %arg8[%c13, %c0_55, %c0_56] : memref<25x1x256xf32, #tpu.memory_space<vmem>>, vector<1x1x256xf32>
    %109 = vector.shape_cast %108 : vector<1x1x256xf32> to vector<1x256xf32>
    %110 = vector.broadcast %109 : vector<1x256xf32> to vector<4x256xf32>
    %111 = arith.mulf %107, %110 : vector<4x256xf32>
    %c52 = arith.constant 52 : index
    %c0_57 = arith.constant 0 : index
    %112 = vector.load %arg12[%c52, %c0_57] : memref<100x256xf32, #tpu.memory_space<vmem>>, vector<4x256xf32>
    tpu.vector_store %arg12[%c52, %c0_57], %111 {strides = array<i32>} : memref<100x256xf32, #tpu.memory_space<vmem>>, vector<4x256xf32>,
    %113 = vector.extract_strided_slice %7 {offsets = [0, 2], sizes = [4, 254], strides = [1, 1]} : vector<4x256xf32> to vector<4x254xf32>
    %114 = vector.extract_strided_slice %7 {offsets = [0, 0], sizes = [4, 2], strides = [1, 1]} : vector<4x256xf32> to vector<4x2xf32>
    %115 = tpu.concatenate %113, %114 in 1 : vector<4x254xf32>, vector<4x2xf32> -> vector<4x256xf32>
    %c14 = arith.constant 14 : index
    %c0_58 = arith.constant 0 : index
    %c0_59 = arith.constant 0 : index
    %116 = vector.load %arg8[%c14, %c0_58, %c0_59] : memref<25x1x256xf32, #tpu.memory_space<vmem>>, vector<1x1x256xf32>
    %117 = vector.shape_cast %116 : vector<1x1x256xf32> to vector<1x256xf32>
    %118 = vector.broadcast %117 : vector<1x256xf32> to vector<4x256xf32>
    %119 = arith.mulf %115, %118 : vector<4x256xf32>
    %c56 = arith.constant 56 : index
    %c0_60 = arith.constant 0 : index
    %120 = vector.load %arg12[%c56, %c0_60] : memref<100x256xf32, #tpu.memory_space<vmem>>, vector<4x256xf32>
    tpu.vector_store %arg12[%c56, %c0_60], %119 {strides = array<i32>} : memref<100x256xf32, #tpu.memory_space<vmem>>, vector<4x256xf32>,
    %121 = vector.extract_strided_slice %7 {offsets = [0, 14], sizes = [4, 242], strides = [1, 1]} : vector<4x256xf32> to vector<4x242xf32>
    %122 = vector.extract_strided_slice %7 {offsets = [0, 0], sizes = [4, 14], strides = [1, 1]} : vector<4x256xf32> to vector<4x14xf32>
    %123 = tpu.concatenate %121, %122 in 1 : vector<4x242xf32>, vector<4x14xf32> -> vector<4x256xf32>
    %c15 = arith.constant 15 : index
    %c0_61 = arith.constant 0 : index
    %c0_62 = arith.constant 0 : index
    %124 = vector.load %arg8[%c15, %c0_61, %c0_62] : memref<25x1x256xf32, #tpu.memory_space<vmem>>, vector<1x1x256xf32>
    %125 = vector.shape_cast %124 : vector<1x1x256xf32> to vector<1x256xf32>
    %126 = vector.broadcast %125 : vector<1x256xf32> to vector<4x256xf32>
    %127 = arith.mulf %123, %126 : vector<4x256xf32>
    %c60 = arith.constant 60 : index
    %c0_63 = arith.constant 0 : index
    %128 = vector.load %arg12[%c60, %c0_63] : memref<100x256xf32, #tpu.memory_space<vmem>>, vector<4x256xf32>
    tpu.vector_store %arg12[%c60, %c0_63], %127 {strides = array<i32>} : memref<100x256xf32, #tpu.memory_space<vmem>>, vector<4x256xf32>,
    %129 = vector.extract_strided_slice %7 {offsets = [0, 15], sizes = [4, 241], strides = [1, 1]} : vector<4x256xf32> to vector<4x241xf32>
    %130 = vector.extract_strided_slice %7 {offsets = [0, 0], sizes = [4, 15], strides = [1, 1]} : vector<4x256xf32> to vector<4x15xf32>
    %131 = tpu.concatenate %129, %130 in 1 : vector<4x241xf32>, vector<4x15xf32> -> vector<4x256xf32>
    %c16_64 = arith.constant 16 : index
    %c0_65 = arith.constant 0 : index
    %c0_66 = arith.constant 0 : index
    %132 = vector.load %arg8[%c16_64, %c0_65, %c0_66] : memref<25x1x256xf32, #tpu.memory_space<vmem>>, vector<1x1x256xf32>
    %133 = vector.shape_cast %132 : vector<1x1x256xf32> to vector<1x256xf32>
    %134 = vector.broadcast %133 : vector<1x256xf32> to vector<4x256xf32>
    %135 = arith.mulf %131, %134 : vector<4x256xf32>
    %c64 = arith.constant 64 : index
    %c0_67 = arith.constant 0 : index
    %136 = vector.load %arg12[%c64, %c0_67] : memref<100x256xf32, #tpu.memory_space<vmem>>, vector<4x256xf32>
    tpu.vector_store %arg12[%c64, %c0_67], %135 {strides = array<i32>} : memref<100x256xf32, #tpu.memory_space<vmem>>, vector<4x256xf32>,
    %137 = vector.extract_strided_slice %7 {offsets = [0, 16], sizes = [4, 240], strides = [1, 1]} : vector<4x256xf32> to vector<4x240xf32>
    %138 = vector.extract_strided_slice %7 {offsets = [0, 0], sizes = [4, 16], strides = [1, 1]} : vector<4x256xf32> to vector<4x16xf32>
    %139 = tpu.concatenate %137, %138 in 1 : vector<4x240xf32>, vector<4x16xf32> -> vector<4x256xf32>
    %c17 = arith.constant 17 : index
    %c0_68 = arith.constant 0 : index
    %c0_69 = arith.constant 0 : index
    %140 = vector.load %arg8[%c17, %c0_68, %c0_69] : memref<25x1x256xf32, #tpu.memory_space<vmem>>, vector<1x1x256xf32>
    %141 = vector.shape_cast %140 : vector<1x1x256xf32> to vector<1x256xf32>
    %142 = vector.broadcast %141 : vector<1x256xf32> to vector<4x256xf32>
    %143 = arith.mulf %139, %142 : vector<4x256xf32>
    %c68 = arith.constant 68 : index
    %c0_70 = arith.constant 0 : index
    %144 = vector.load %arg12[%c68, %c0_70] : memref<100x256xf32, #tpu.memory_space<vmem>>, vector<4x256xf32>
    tpu.vector_store %arg12[%c68, %c0_70], %143 {strides = array<i32>} : memref<100x256xf32, #tpu.memory_space<vmem>>, vector<4x256xf32>,
    %145 = vector.extract_strided_slice %7 {offsets = [0, 17], sizes = [4, 239], strides = [1, 1]} : vector<4x256xf32> to vector<4x239xf32>
    %146 = vector.extract_strided_slice %7 {offsets = [0, 0], sizes = [4, 17], strides = [1, 1]} : vector<4x256xf32> to vector<4x17xf32>
    %147 = tpu.concatenate %145, %146 in 1 : vector<4x239xf32>, vector<4x17xf32> -> vector<4x256xf32>
    %c18 = arith.constant 18 : index
    %c0_71 = arith.constant 0 : index
    %c0_72 = arith.constant 0 : index
    %148 = vector.load %arg8[%c18, %c0_71, %c0_72] : memref<25x1x256xf32, #tpu.memory_space<vmem>>, vector<1x1x256xf32>
    %149 = vector.shape_cast %148 : vector<1x1x256xf32> to vector<1x256xf32>
    %150 = vector.broadcast %149 : vector<1x256xf32> to vector<4x256xf32>
    %151 = arith.mulf %147, %150 : vector<4x256xf32>
    %c72 = arith.constant 72 : index
    %c0_73 = arith.constant 0 : index
    %152 = vector.load %arg12[%c72, %c0_73] : memref<100x256xf32, #tpu.memory_space<vmem>>, vector<4x256xf32>
    tpu.vector_store %arg12[%c72, %c0_73], %151 {strides = array<i32>} : memref<100x256xf32, #tpu.memory_space<vmem>>, vector<4x256xf32>,
    %153 = vector.extract_strided_slice %7 {offsets = [0, 18], sizes = [4, 238], strides = [1, 1]} : vector<4x256xf32> to vector<4x238xf32>
    %154 = vector.extract_strided_slice %7 {offsets = [0, 0], sizes = [4, 18], strides = [1, 1]} : vector<4x256xf32> to vector<4x18xf32>
    %155 = tpu.concatenate %153, %154 in 1 : vector<4x238xf32>, vector<4x18xf32> -> vector<4x256xf32>
    %c19 = arith.constant 19 : index
    %c0_74 = arith.constant 0 : index
    %c0_75 = arith.constant 0 : index
    %156 = vector.load %arg8[%c19, %c0_74, %c0_75] : memref<25x1x256xf32, #tpu.memory_space<vmem>>, vector<1x1x256xf32>
    %157 = vector.shape_cast %156 : vector<1x1x256xf32> to vector<1x256xf32>
    %158 = vector.broadcast %157 : vector<1x256xf32> to vector<4x256xf32>
    %159 = arith.mulf %155, %158 : vector<4x256xf32>
    %c76 = arith.constant 76 : index
    %c0_76 = arith.constant 0 : index
    %160 = vector.load %arg12[%c76, %c0_76] : memref<100x256xf32, #tpu.memory_space<vmem>>, vector<4x256xf32>
    tpu.vector_store %arg12[%c76, %c0_76], %159 {strides = array<i32>} : memref<100x256xf32, #tpu.memory_space<vmem>>, vector<4x256xf32>,
    %161 = vector.extract_strided_slice %7 {offsets = [0, 30], sizes = [4, 226], strides = [1, 1]} : vector<4x256xf32> to vector<4x226xf32>
    %162 = vector.extract_strided_slice %7 {offsets = [0, 0], sizes = [4, 30], strides = [1, 1]} : vector<4x256xf32> to vector<4x30xf32>
    %163 = tpu.concatenate %161, %162 in 1 : vector<4x226xf32>, vector<4x30xf32> -> vector<4x256xf32>
    %c20_77 = arith.constant 20 : index
    %c0_78 = arith.constant 0 : index
    %c0_79 = arith.constant 0 : index
    %164 = vector.load %arg8[%c20_77, %c0_78, %c0_79] : memref<25x1x256xf32, #tpu.memory_space<vmem>>, vector<1x1x256xf32>
    %165 = vector.shape_cast %164 : vector<1x1x256xf32> to vector<1x256xf32>
    %166 = vector.broadcast %165 : vector<1x256xf32> to vector<4x256xf32>
    %167 = arith.mulf %163, %166 : vector<4x256xf32>
    %c80 = arith.constant 80 : index
    %c0_80 = arith.constant 0 : index
    %168 = vector.load %arg12[%c80, %c0_80] : memref<100x256xf32, #tpu.memory_space<vmem>>, vector<4x256xf32>
    tpu.vector_store %arg12[%c80, %c0_80], %167 {strides = array<i32>} : memref<100x256xf32, #tpu.memory_space<vmem>>, vector<4x256xf32>,
    %169 = vector.extract_strided_slice %7 {offsets = [0, 31], sizes = [4, 225], strides = [1, 1]} : vector<4x256xf32> to vector<4x225xf32>
    %170 = vector.extract_strided_slice %7 {offsets = [0, 0], sizes = [4, 31], strides = [1, 1]} : vector<4x256xf32> to vector<4x31xf32>
    %171 = tpu.concatenate %169, %170 in 1 : vector<4x225xf32>, vector<4x31xf32> -> vector<4x256xf32>
    %c21 = arith.constant 21 : index
    %c0_81 = arith.constant 0 : index
    %c0_82 = arith.constant 0 : index
    %172 = vector.load %arg8[%c21, %c0_81, %c0_82] : memref<25x1x256xf32, #tpu.memory_space<vmem>>, vector<1x1x256xf32>
    %173 = vector.shape_cast %172 : vector<1x1x256xf32> to vector<1x256xf32>
    %174 = vector.broadcast %173 : vector<1x256xf32> to vector<4x256xf32>
    %175 = arith.mulf %171, %174 : vector<4x256xf32>
    %c84 = arith.constant 84 : index
    %c0_83 = arith.constant 0 : index
    %176 = vector.load %arg12[%c84, %c0_83] : memref<100x256xf32, #tpu.memory_space<vmem>>, vector<4x256xf32>
    tpu.vector_store %arg12[%c84, %c0_83], %175 {strides = array<i32>} : memref<100x256xf32, #tpu.memory_space<vmem>>, vector<4x256xf32>,
    %177 = vector.extract_strided_slice %7 {offsets = [0, 32], sizes = [4, 224], strides = [1, 1]} : vector<4x256xf32> to vector<4x224xf32>
    %178 = vector.extract_strided_slice %7 {offsets = [0, 0], sizes = [4, 32], strides = [1, 1]} : vector<4x256xf32> to vector<4x32xf32>
    %179 = tpu.concatenate %177, %178 in 1 : vector<4x224xf32>, vector<4x32xf32> -> vector<4x256xf32>
    %c22 = arith.constant 22 : index
    %c0_84 = arith.constant 0 : index
    %c0_85 = arith.constant 0 : index
    %180 = vector.load %arg8[%c22, %c0_84, %c0_85] : memref<25x1x256xf32, #tpu.memory_space<vmem>>, vector<1x1x256xf32>
    %181 = vector.shape_cast %180 : vector<1x1x256xf32> to vector<1x256xf32>
    %182 = vector.broadcast %181 : vector<1x256xf32> to vector<4x256xf32>
    %183 = arith.mulf %179, %182 : vector<4x256xf32>
    %c88 = arith.constant 88 : index
    %c0_86 = arith.constant 0 : index
    %184 = vector.load %arg12[%c88, %c0_86] : memref<100x256xf32, #tpu.memory_space<vmem>>, vector<4x256xf32>
    tpu.vector_store %arg12[%c88, %c0_86], %183 {strides = array<i32>} : memref<100x256xf32, #tpu.memory_space<vmem>>, vector<4x256xf32>,
    %185 = vector.extract_strided_slice %7 {offsets = [0, 33], sizes = [4, 223], strides = [1, 1]} : vector<4x256xf32> to vector<4x223xf32>
    %186 = vector.extract_strided_slice %7 {offsets = [0, 0], sizes = [4, 33], strides = [1, 1]} : vector<4x256xf32> to vector<4x33xf32>
    %187 = tpu.concatenate %185, %186 in 1 : vector<4x223xf32>, vector<4x33xf32> -> vector<4x256xf32>
    %c23 = arith.constant 23 : index
    %c0_87 = arith.constant 0 : index
    %c0_88 = arith.constant 0 : index
    %188 = vector.load %arg8[%c23, %c0_87, %c0_88] : memref<25x1x256xf32, #tpu.memory_space<vmem>>, vector<1x1x256xf32>
    %189 = vector.shape_cast %188 : vector<1x1x256xf32> to vector<1x256xf32>
    %190 = vector.broadcast %189 : vector<1x256xf32> to vector<4x256xf32>
    %191 = arith.mulf %187, %190 : vector<4x256xf32>
    %c92 = arith.constant 92 : index
    %c0_89 = arith.constant 0 : index
    %192 = vector.load %arg12[%c92, %c0_89] : memref<100x256xf32, #tpu.memory_space<vmem>>, vector<4x256xf32>
    tpu.vector_store %arg12[%c92, %c0_89], %191 {strides = array<i32>} : memref<100x256xf32, #tpu.memory_space<vmem>>, vector<4x256xf32>,
    %193 = vector.extract_strided_slice %7 {offsets = [0, 34], sizes = [4, 222], strides = [1, 1]} : vector<4x256xf32> to vector<4x222xf32>
    %194 = vector.extract_strided_slice %7 {offsets = [0, 0], sizes = [4, 34], strides = [1, 1]} : vector<4x256xf32> to vector<4x34xf32>
    %195 = tpu.concatenate %193, %194 in 1 : vector<4x222xf32>, vector<4x34xf32> -> vector<4x256xf32>
    %c24_90 = arith.constant 24 : index
    %c0_91 = arith.constant 0 : index
    %c0_92 = arith.constant 0 : index
    %196 = vector.load %arg8[%c24_90, %c0_91, %c0_92] : memref<25x1x256xf32, #tpu.memory_space<vmem>>, vector<1x1x256xf32>
    %197 = vector.shape_cast %196 : vector<1x1x256xf32> to vector<1x256xf32>
    %198 = vector.broadcast %197 : vector<1x256xf32> to vector<4x256xf32>
    %199 = arith.mulf %195, %198 : vector<4x256xf32>
    %c96 = arith.constant 96 : index
    %c0_93 = arith.constant 0 : index
    %200 = vector.load %arg12[%c96, %c0_93] : memref<100x256xf32, #tpu.memory_space<vmem>>, vector<4x256xf32>
    tpu.vector_store %arg12[%c96, %c0_93], %199 {strides = array<i32>} : memref<100x256xf32, #tpu.memory_space<vmem>>, vector<4x256xf32>,
    %c0_94 = arith.constant 0 : index
    %c0_95 = arith.constant 0 : index
    %201 = vector.load %arg12[%c0_94, %c0_95] : memref<100x256xf32, #tpu.memory_space<vmem>>, vector<100x256xf32>
    %202 = arith.truncf %201 : vector<100x256xf32> to vector<100x256xbf16>
    %cst = arith.constant dense<0.000000e+00> : vector<4x256xf32>
    %203 = tpu.matmul %0, %202, %cst {dimension_numbers = #tpu.dot_dimension_numbers<[1], [0], [0], [1], [0, 0, 1, 1], [], []>} : vector<4x100xbf16>, vector<100x256xbf16>, vector<4x256xf32> -> vector<4x256xf32>
    %204 = vector.broadcast %2 : vector<4x1xf32> to vector<4x256xf32>
    %205 = arith.addf %203, %204 : vector<4x256xf32>
    %cst_96 = arith.constant 0.000000e+00 : f32
    %206 = vector.broadcast %cst_96 : f32 to vector<4x256xf32>
    %207 = arith.maximumf %205, %206 : vector<4x256xf32>
    %208 = vector.extract_strided_slice %207 {offsets = [0, 239], sizes = [4, 17], strides = [1, 1]} : vector<4x256xf32> to vector<4x17xf32>
    %209 = vector.extract_strided_slice %207 {offsets = [0, 0], sizes = [4, 239], strides = [1, 1]} : vector<4x256xf32> to vector<4x239xf32>
    %210 = tpu.concatenate %208, %209 in 1 : vector<4x17xf32>, vector<4x239xf32> -> vector<4x256xf32>
    %c0_97 = arith.constant 0 : index
    %c0_98 = arith.constant 0 : index
    %c0_99 = arith.constant 0 : index
    %211 = vector.load %arg9[%c0_97, %c0_98, %c0_99] : memref<9x1x256xf32, #tpu.memory_space<vmem>>, vector<1x1x256xf32>
    %212 = vector.shape_cast %211 : vector<1x1x256xf32> to vector<1x256xf32>
    %213 = vector.broadcast %212 : vector<1x256xf32> to vector<4x256xf32>
    %214 = arith.mulf %210, %213 : vector<4x256xf32>
    %c0_100 = arith.constant 0 : index
    %c0_101 = arith.constant 0 : index
    %215 = vector.load %arg13[%c0_100, %c0_101] : memref<36x256xf32, #tpu.memory_space<vmem>>, vector<4x256xf32>
    tpu.vector_store %arg13[%c0_100, %c0_101], %214 {strides = array<i32>} : memref<36x256xf32, #tpu.memory_space<vmem>>, vector<4x256xf32>,
    %216 = vector.extract_strided_slice %207 {offsets = [0, 240], sizes = [4, 16], strides = [1, 1]} : vector<4x256xf32> to vector<4x16xf32>
    %217 = vector.extract_strided_slice %207 {offsets = [0, 0], sizes = [4, 240], strides = [1, 1]} : vector<4x256xf32> to vector<4x240xf32>
    %218 = tpu.concatenate %216, %217 in 1 : vector<4x16xf32>, vector<4x240xf32> -> vector<4x256xf32>
    %c1_102 = arith.constant 1 : index
    %c0_103 = arith.constant 0 : index
    %c0_104 = arith.constant 0 : index
    %219 = vector.load %arg9[%c1_102, %c0_103, %c0_104] : memref<9x1x256xf32, #tpu.memory_space<vmem>>, vector<1x1x256xf32>
    %220 = vector.shape_cast %219 : vector<1x1x256xf32> to vector<1x256xf32>
    %221 = vector.broadcast %220 : vector<1x256xf32> to vector<4x256xf32>
    %222 = arith.mulf %218, %221 : vector<4x256xf32>
    %c4_105 = arith.constant 4 : index
    %c0_106 = arith.constant 0 : index
    %223 = vector.load %arg13[%c4_105, %c0_106] : memref<36x256xf32, #tpu.memory_space<vmem>>, vector<4x256xf32>
    tpu.vector_store %arg13[%c4_105, %c0_106], %222 {strides = array<i32>} : memref<36x256xf32, #tpu.memory_space<vmem>>, vector<4x256xf32>,
    %224 = vector.extract_strided_slice %207 {offsets = [0, 241], sizes = [4, 15], strides = [1, 1]} : vector<4x256xf32> to vector<4x15xf32>
    %225 = vector.extract_strided_slice %207 {offsets = [0, 0], sizes = [4, 241], strides = [1, 1]} : vector<4x256xf32> to vector<4x241xf32>
    %226 = tpu.concatenate %224, %225 in 1 : vector<4x15xf32>, vector<4x241xf32> -> vector<4x256xf32>
    %c2_107 = arith.constant 2 : index
    %c0_108 = arith.constant 0 : index
    %c0_109 = arith.constant 0 : index
    %227 = vector.load %arg9[%c2_107, %c0_108, %c0_109] : memref<9x1x256xf32, #tpu.memory_space<vmem>>, vector<1x1x256xf32>
    %228 = vector.shape_cast %227 : vector<1x1x256xf32> to vector<1x256xf32>
    %229 = vector.broadcast %228 : vector<1x256xf32> to vector<4x256xf32>
    %230 = arith.mulf %226, %229 : vector<4x256xf32>
    %c8_110 = arith.constant 8 : index
    %c0_111 = arith.constant 0 : index
    %231 = vector.load %arg13[%c8_110, %c0_111] : memref<36x256xf32, #tpu.memory_space<vmem>>, vector<4x256xf32>
    tpu.vector_store %arg13[%c8_110, %c0_111], %230 {strides = array<i32>} : memref<36x256xf32, #tpu.memory_space<vmem>>, vector<4x256xf32>,
    %232 = vector.extract_strided_slice %207 {offsets = [0, 255], sizes = [4, 1], strides = [1, 1]} : vector<4x256xf32> to vector<4x1xf32>
    %233 = vector.extract_strided_slice %207 {offsets = [0, 0], sizes = [4, 255], strides = [1, 1]} : vector<4x256xf32> to vector<4x255xf32>
    %234 = tpu.concatenate %232, %233 in 1 : vector<4x1xf32>, vector<4x255xf32> -> vector<4x256xf32>
    %c3_112 = arith.constant 3 : index
    %c0_113 = arith.constant 0 : index
    %c0_114 = arith.constant 0 : index
    %235 = vector.load %arg9[%c3_112, %c0_113, %c0_114] : memref<9x1x256xf32, #tpu.memory_space<vmem>>, vector<1x1x256xf32>
    %236 = vector.shape_cast %235 : vector<1x1x256xf32> to vector<1x256xf32>
    %237 = vector.broadcast %236 : vector<1x256xf32> to vector<4x256xf32>
    %238 = arith.mulf %234, %237 : vector<4x256xf32>
    %c12_115 = arith.constant 12 : index
    %c0_116 = arith.constant 0 : index
    %239 = vector.load %arg13[%c12_115, %c0_116] : memref<36x256xf32, #tpu.memory_space<vmem>>, vector<4x256xf32>
    tpu.vector_store %arg13[%c12_115, %c0_116], %238 {strides = array<i32>} : memref<36x256xf32, #tpu.memory_space<vmem>>, vector<4x256xf32>,
    %c16_117 = arith.constant 16 : index
    %c0_118 = arith.constant 0 : index
    %240 = vector.load %arg13[%c16_117, %c0_118] : memref<36x256xf32, #tpu.memory_space<vmem>>, vector<4x256xf32>
    tpu.vector_store %arg13[%c16_117, %c0_118], %207 {strides = array<i32>} : memref<36x256xf32, #tpu.memory_space<vmem>>, vector<4x256xf32>,
    %241 = vector.extract_strided_slice %207 {offsets = [0, 1], sizes = [4, 255], strides = [1, 1]} : vector<4x256xf32> to vector<4x255xf32>
    %242 = vector.extract_strided_slice %207 {offsets = [0, 0], sizes = [4, 1], strides = [1, 1]} : vector<4x256xf32> to vector<4x1xf32>
    %243 = tpu.concatenate %241, %242 in 1 : vector<4x255xf32>, vector<4x1xf32> -> vector<4x256xf32>
    %c5_119 = arith.constant 5 : index
    %c0_120 = arith.constant 0 : index
    %c0_121 = arith.constant 0 : index
    %244 = vector.load %arg9[%c5_119, %c0_120, %c0_121] : memref<9x1x256xf32, #tpu.memory_space<vmem>>, vector<1x1x256xf32>
    %245 = vector.shape_cast %244 : vector<1x1x256xf32> to vector<1x256xf32>
    %246 = vector.broadcast %245 : vector<1x256xf32> to vector<4x256xf32>
    %247 = arith.mulf %243, %246 : vector<4x256xf32>
    %c20_122 = arith.constant 20 : index
    %c0_123 = arith.constant 0 : index
    %248 = vector.load %arg13[%c20_122, %c0_123] : memref<36x256xf32, #tpu.memory_space<vmem>>, vector<4x256xf32>
    tpu.vector_store %arg13[%c20_122, %c0_123], %247 {strides = array<i32>} : memref<36x256xf32, #tpu.memory_space<vmem>>, vector<4x256xf32>,
    %249 = vector.extract_strided_slice %207 {offsets = [0, 15], sizes = [4, 241], strides = [1, 1]} : vector<4x256xf32> to vector<4x241xf32>
    %250 = vector.extract_strided_slice %207 {offsets = [0, 0], sizes = [4, 15], strides = [1, 1]} : vector<4x256xf32> to vector<4x15xf32>
    %251 = tpu.concatenate %249, %250 in 1 : vector<4x241xf32>, vector<4x15xf32> -> vector<4x256xf32>
    %c6_124 = arith.constant 6 : index
    %c0_125 = arith.constant 0 : index
    %c0_126 = arith.constant 0 : index
    %252 = vector.load %arg9[%c6_124, %c0_125, %c0_126] : memref<9x1x256xf32, #tpu.memory_space<vmem>>, vector<1x1x256xf32>
    %253 = vector.shape_cast %252 : vector<1x1x256xf32> to vector<1x256xf32>
    %254 = vector.broadcast %253 : vector<1x256xf32> to vector<4x256xf32>
    %255 = arith.mulf %251, %254 : vector<4x256xf32>
    %c24_127 = arith.constant 24 : index
    %c0_128 = arith.constant 0 : index
    %256 = vector.load %arg13[%c24_127, %c0_128] : memref<36x256xf32, #tpu.memory_space<vmem>>, vector<4x256xf32>
    tpu.vector_store %arg13[%c24_127, %c0_128], %255 {strides = array<i32>} : memref<36x256xf32, #tpu.memory_space<vmem>>, vector<4x256xf32>,
    %257 = vector.extract_strided_slice %207 {offsets = [0, 16], sizes = [4, 240], strides = [1, 1]} : vector<4x256xf32> to vector<4x240xf32>
    %258 = vector.extract_strided_slice %207 {offsets = [0, 0], sizes = [4, 16], strides = [1, 1]} : vector<4x256xf32> to vector<4x16xf32>
    %259 = tpu.concatenate %257, %258 in 1 : vector<4x240xf32>, vector<4x16xf32> -> vector<4x256xf32>
    %c7_129 = arith.constant 7 : index
    %c0_130 = arith.constant 0 : index
    %c0_131 = arith.constant 0 : index
    %260 = vector.load %arg9[%c7_129, %c0_130, %c0_131] : memref<9x1x256xf32, #tpu.memory_space<vmem>>, vector<1x1x256xf32>
    %261 = vector.shape_cast %260 : vector<1x1x256xf32> to vector<1x256xf32>
    %262 = vector.broadcast %261 : vector<1x256xf32> to vector<4x256xf32>
    %263 = arith.mulf %259, %262 : vector<4x256xf32>
    %c28_132 = arith.constant 28 : index
    %c0_133 = arith.constant 0 : index
    %264 = vector.load %arg13[%c28_132, %c0_133] : memref<36x256xf32, #tpu.memory_space<vmem>>, vector<4x256xf32>
    tpu.vector_store %arg13[%c28_132, %c0_133], %263 {strides = array<i32>} : memref<36x256xf32, #tpu.memory_space<vmem>>, vector<4x256xf32>,
    %265 = vector.extract_strided_slice %207 {offsets = [0, 17], sizes = [4, 239], strides = [1, 1]} : vector<4x256xf32> to vector<4x239xf32>
    %266 = vector.extract_strided_slice %207 {offsets = [0, 0], sizes = [4, 17], strides = [1, 1]} : vector<4x256xf32> to vector<4x17xf32>
    %267 = tpu.concatenate %265, %266 in 1 : vector<4x239xf32>, vector<4x17xf32> -> vector<4x256xf32>
    %c8_134 = arith.constant 8 : index
    %c0_135 = arith.constant 0 : index
    %c0_136 = arith.constant 0 : index
    %268 = vector.load %arg9[%c8_134, %c0_135, %c0_136] : memref<9x1x256xf32, #tpu.memory_space<vmem>>, vector<1x1x256xf32>
    %269 = vector.shape_cast %268 : vector<1x1x256xf32> to vector<1x256xf32>
    %270 = vector.broadcast %269 : vector<1x256xf32> to vector<4x256xf32>
    %271 = arith.mulf %267, %270 : vector<4x256xf32>
    %c32_137 = arith.constant 32 : index
    %c0_138 = arith.constant 0 : index
    %272 = vector.load %arg13[%c32_137, %c0_138] : memref<36x256xf32, #tpu.memory_space<vmem>>, vector<4x256xf32>
    tpu.vector_store %arg13[%c32_137, %c0_138], %271 {strides = array<i32>} : memref<36x256xf32, #tpu.memory_space<vmem>>, vector<4x256xf32>,
    %c0_139 = arith.constant 0 : index
    %c0_140 = arith.constant 0 : index
    %273 = vector.load %arg13[%c0_139, %c0_140] : memref<36x256xf32, #tpu.memory_space<vmem>>, vector<36x256xf32>
    %274 = arith.truncf %273 : vector<36x256xf32> to vector<36x256xbf16>
    %cst_141 = arith.constant dense<0.000000e+00> : vector<8x256xf32>
    %275 = tpu.matmul %1, %274, %cst_141 {dimension_numbers = #tpu.dot_dimension_numbers<[1], [0], [0], [1], [0, 0, 1, 1], [], []>} : vector<8x36xbf16>, vector<36x256xbf16>, vector<8x256xf32> -> vector<8x256xf32>
    %276 = vector.broadcast %3 : vector<8x1xf32> to vector<8x256xf32>
    %277 = arith.addf %275, %276 : vector<8x256xf32>
    %cst_142 = arith.constant 0.000000e+00 : f32
    %278 = vector.broadcast %cst_142 : f32 to vector<8x256xf32>
    %279 = arith.maximumf %277, %278 : vector<8x256xf32>
    %280 = arith.truncf %279 : vector<8x256xf32> to vector<8x256xbf16>
    %cst_143 = arith.constant dense<0.000000e+00> : vector<8x64xf32>
    %281 = tpu.matmul %280, %4, %cst_143 {dimension_numbers = #tpu.dot_dimension_numbers<[1], [0], [0], [1], [0, 0, 1, 1], [], []>} : vector<8x256xbf16>, vector<256x64xbf16>, vector<8x64xf32> -> vector<8x64xf32>
    %282 = vector.extract_strided_slice %281 {offsets = [0, 55], sizes = [8, 9], strides = [1, 1]} : vector<8x64xf32> to vector<8x9xf32>
    %283 = vector.extract_strided_slice %281 {offsets = [0, 0], sizes = [8, 55], strides = [1, 1]} : vector<8x64xf32> to vector<8x55xf32>
    %284 = tpu.concatenate %282, %283 in 1 : vector<8x9xf32>, vector<8x55xf32> -> vector<8x64xf32>
    %c0_144 = arith.constant 0 : index
    %c0_145 = arith.constant 0 : index
    %c0_146 = arith.constant 0 : index
    %285 = vector.load %arg10[%c0_144, %c0_145, %c0_146] : memref<9x1x64xf32, #tpu.memory_space<vmem>>, vector<1x1x64xf32>
    %286 = vector.shape_cast %285 : vector<1x1x64xf32> to vector<1x64xf32>
    %287 = vector.broadcast %286 : vector<1x64xf32> to vector<8x64xf32>
    %288 = arith.mulf %284, %287 : vector<8x64xf32>
    %289 = arith.maximumf %281, %288 : vector<8x64xf32>
    %290 = vector.extract_strided_slice %281 {offsets = [0, 56], sizes = [8, 8], strides = [1, 1]} : vector<8x64xf32> to vector<8x8xf32>
    %291 = vector.extract_strided_slice %281 {offsets = [0, 0], sizes = [8, 56], strides = [1, 1]} : vector<8x64xf32> to vector<8x56xf32>
    %292 = tpu.concatenate %290, %291 in 1 : vector<8x8xf32>, vector<8x56xf32> -> vector<8x64xf32>
    %c1_147 = arith.constant 1 : index
    %c0_148 = arith.constant 0 : index
    %c0_149 = arith.constant 0 : index
    %293 = vector.load %arg10[%c1_147, %c0_148, %c0_149] : memref<9x1x64xf32, #tpu.memory_space<vmem>>, vector<1x1x64xf32>
    %294 = vector.shape_cast %293 : vector<1x1x64xf32> to vector<1x64xf32>
    %295 = vector.broadcast %294 : vector<1x64xf32> to vector<8x64xf32>
    %296 = arith.mulf %292, %295 : vector<8x64xf32>
    %297 = arith.maximumf %289, %296 : vector<8x64xf32>
    %298 = vector.extract_strided_slice %281 {offsets = [0, 57], sizes = [8, 7], strides = [1, 1]} : vector<8x64xf32> to vector<8x7xf32>
    %299 = vector.extract_strided_slice %281 {offsets = [0, 0], sizes = [8, 57], strides = [1, 1]} : vector<8x64xf32> to vector<8x57xf32>
    %300 = tpu.concatenate %298, %299 in 1 : vector<8x7xf32>, vector<8x57xf32> -> vector<8x64xf32>
    %c2_150 = arith.constant 2 : index
    %c0_151 = arith.constant 0 : index
    %c0_152 = arith.constant 0 : index
    %301 = vector.load %arg10[%c2_150, %c0_151, %c0_152] : memref<9x1x64xf32, #tpu.memory_space<vmem>>, vector<1x1x64xf32>
    %302 = vector.shape_cast %301 : vector<1x1x64xf32> to vector<1x64xf32>
    %303 = vector.broadcast %302 : vector<1x64xf32> to vector<8x64xf32>
    %304 = arith.mulf %300, %303 : vector<8x64xf32>
    %305 = arith.maximumf %297, %304 : vector<8x64xf32>
    %306 = vector.extract_strided_slice %281 {offsets = [0, 63], sizes = [8, 1], strides = [1, 1]} : vector<8x64xf32> to vector<8x1xf32>
    %307 = vector.extract_strided_slice %281 {offsets = [0, 0], sizes = [8, 63], strides = [1, 1]} : vector<8x64xf32> to vector<8x63xf32>
    %308 = tpu.concatenate %306, %307 in 1 : vector<8x1xf32>, vector<8x63xf32> -> vector<8x64xf32>
    %c3_153 = arith.constant 3 : index
    %c0_154 = arith.constant 0 : index
    %c0_155 = arith.constant 0 : index
    %309 = vector.load %arg10[%c3_153, %c0_154, %c0_155] : memref<9x1x64xf32, #tpu.memory_space<vmem>>, vector<1x1x64xf32>
    %310 = vector.shape_cast %309 : vector<1x1x64xf32> to vector<1x64xf32>
    %311 = vector.broadcast %310 : vector<1x64xf32> to vector<8x64xf32>
    %312 = arith.mulf %308, %311 : vector<8x64xf32>
    %313 = arith.maximumf %305, %312 : vector<8x64xf32>
    %314 = vector.extract_strided_slice %281 {offsets = [0, 1], sizes = [8, 63], strides = [1, 1]} : vector<8x64xf32> to vector<8x63xf32>
    %315 = vector.extract_strided_slice %281 {offsets = [0, 0], sizes = [8, 1], strides = [1, 1]} : vector<8x64xf32> to vector<8x1xf32>
    %316 = tpu.concatenate %314, %315 in 1 : vector<8x63xf32>, vector<8x1xf32> -> vector<8x64xf32>
    %c5_156 = arith.constant 5 : index
    %c0_157 = arith.constant 0 : index
    %c0_158 = arith.constant 0 : index
    %317 = vector.load %arg10[%c5_156, %c0_157, %c0_158] : memref<9x1x64xf32, #tpu.memory_space<vmem>>, vector<1x1x64xf32>
    %318 = vector.shape_cast %317 : vector<1x1x64xf32> to vector<1x64xf32>
    %319 = vector.broadcast %318 : vector<1x64xf32> to vector<8x64xf32>
    %320 = arith.mulf %316, %319 : vector<8x64xf32>
    %321 = arith.maximumf %313, %320 : vector<8x64xf32>
    %322 = vector.extract_strided_slice %281 {offsets = [0, 7], sizes = [8, 57], strides = [1, 1]} : vector<8x64xf32> to vector<8x57xf32>
    %323 = vector.extract_strided_slice %281 {offsets = [0, 0], sizes = [8, 7], strides = [1, 1]} : vector<8x64xf32> to vector<8x7xf32>
    %324 = tpu.concatenate %322, %323 in 1 : vector<8x57xf32>, vector<8x7xf32> -> vector<8x64xf32>
    %c6_159 = arith.constant 6 : index
    %c0_160 = arith.constant 0 : index
    %c0_161 = arith.constant 0 : index
    %325 = vector.load %arg10[%c6_159, %c0_160, %c0_161] : memref<9x1x64xf32, #tpu.memory_space<vmem>>, vector<1x1x64xf32>
    %326 = vector.shape_cast %325 : vector<1x1x64xf32> to vector<1x64xf32>
    %327 = vector.broadcast %326 : vector<1x64xf32> to vector<8x64xf32>
    %328 = arith.mulf %324, %327 : vector<8x64xf32>
    %329 = arith.maximumf %321, %328 : vector<8x64xf32>
    %330 = vector.extract_strided_slice %281 {offsets = [0, 8], sizes = [8, 56], strides = [1, 1]} : vector<8x64xf32> to vector<8x56xf32>
    %331 = vector.extract_strided_slice %281 {offsets = [0, 0], sizes = [8, 8], strides = [1, 1]} : vector<8x64xf32> to vector<8x8xf32>
    %332 = tpu.concatenate %330, %331 in 1 : vector<8x56xf32>, vector<8x8xf32> -> vector<8x64xf32>
    %c7_162 = arith.constant 7 : index
    %c0_163 = arith.constant 0 : index
    %c0_164 = arith.constant 0 : index
    %333 = vector.load %arg10[%c7_162, %c0_163, %c0_164] : memref<9x1x64xf32, #tpu.memory_space<vmem>>, vector<1x1x64xf32>
    %334 = vector.shape_cast %333 : vector<1x1x64xf32> to vector<1x64xf32>
    %335 = vector.broadcast %334 : vector<1x64xf32> to vector<8x64xf32>
    %336 = arith.mulf %332, %335 : vector<8x64xf32>
    %337 = arith.maximumf %329, %336 : vector<8x64xf32>
    %338 = vector.extract_strided_slice %281 {offsets = [0, 9], sizes = [8, 55], strides = [1, 1]} : vector<8x64xf32> to vector<8x55xf32>
    %339 = vector.extract_strided_slice %281 {offsets = [0, 0], sizes = [8, 9], strides = [1, 1]} : vector<8x64xf32> to vector<8x9xf32>
    %340 = tpu.concatenate %338, %339 in 1 : vector<8x55xf32>, vector<8x9xf32> -> vector<8x64xf32>
    %c8_165 = arith.constant 8 : index
    %c0_166 = arith.constant 0 : index
    %c0_167 = arith.constant 0 : index
    %341 = vector.load %arg10[%c8_165, %c0_166, %c0_167] : memref<9x1x64xf32, #tpu.memory_space<vmem>>, vector<1x1x64xf32>
    %342 = vector.shape_cast %341 : vector<1x1x64xf32> to vector<1x64xf32>
    %343 = vector.broadcast %342 : vector<1x64xf32> to vector<8x64xf32>
    %344 = arith.mulf %340, %343 : vector<8x64xf32>
    %345 = arith.maximumf %337, %344 : vector<8x64xf32>
    %346 = arith.truncf %345 : vector<8x64xf32> to vector<8x64xbf16>
    %cst_168 = arith.constant dense<0.000000e+00> : vector<8x16xf32>
    %347 = tpu.matmul %346, %5, %cst_168 {dimension_numbers = #tpu.dot_dimension_numbers<[1], [0], [0], [1], [0, 0, 1, 1], [], []>} : vector<8x64xbf16>, vector<64x16xbf16>, vector<8x16xf32> -> vector<8x16xf32>
    %c0_169 = arith.constant 0 : index
    %c0_170 = arith.constant 0 : index
    %c0_171 = arith.constant 0 : index
    %348 = vector.load %arg11[%c0_169, %c0_170, %c0_171] : memref<1x8x16xf32, #tpu.memory_space<vmem>>, vector<1x8x16xf32>
    %349 = vector.shape_cast %348 : vector<1x8x16xf32> to vector<8x16xf32>
    %350 = vector.shape_cast %347 : vector<8x16xf32> to vector<1x8x16xf32>
    tpu.vector_store %arg11[%c0_169, %c0_170, %c0_171], %350 {strides = array<i32>} : memref<1x8x16xf32, #tpu.memory_space<vmem>>, vector<1x8x16xf32>,
    return
  }
  func.func @transform_0(%arg0: i32) -> (i32, i32, i32) {
    %c0_i32 = arith.constant 0 : i32
    %c0_i32_0 = arith.constant 0 : i32
    %c0_i32_1 = arith.constant 0 : i32
    return %arg0, %c0_i32, %c0_i32_0 : i32, i32, i32
  }
  func.func @transform_1(%arg0: i32) -> (i32, i32) {
    %c0_i32 = arith.constant 0 : i32
    %c0_i32_0 = arith.constant 0 : i32
    %c0_i32_1 = arith.constant 0 : i32
    return %c0_i32, %c0_i32_0 : i32, i32
  }
  func.func @transform_2(%arg0: i32) -> (i32, i32) {
    %c0_i32 = arith.constant 0 : i32
    %c0_i32_0 = arith.constant 0 : i32
    %c0_i32_1 = arith.constant 0 : i32
    return %c0_i32, %c0_i32_0 : i32, i32
  }
  func.func @transform_3(%arg0: i32) -> (i32, i32) {
    %c0_i32 = arith.constant 0 : i32
    %c0_i32_0 = arith.constant 0 : i32
    %c0_i32_1 = arith.constant 0 : i32
    return %c0_i32, %c0_i32_0 : i32, i32
  }
  func.func @transform_4(%arg0: i32) -> (i32, i32) {
    %c0_i32 = arith.constant 0 : i32
    %c0_i32_0 = arith.constant 0 : i32
    %c0_i32_1 = arith.constant 0 : i32
    return %c0_i32, %c0_i32_0 : i32, i32
  }
  func.func @transform_5(%arg0: i32) -> (i32, i32) {
    %c0_i32 = arith.constant 0 : i32
    %c0_i32_0 = arith.constant 0 : i32
    %c0_i32_1 = arith.constant 0 : i32
    return %c0_i32, %c0_i32_0 : i32, i32
  }
  func.func @transform_6(%arg0: i32) -> (i32, i32) {
    %c0_i32 = arith.constant 0 : i32
    %c0_i32_0 = arith.constant 0 : i32
    %c0_i32_1 = arith.constant 0 : i32
    return %c0_i32, %c0_i32_0 : i32, i32
  }
  func.func @transform_7(%arg0: i32) -> (i32, i32, i32) {
    %c0_i32 = arith.constant 0 : i32
    %c0_i32_0 = arith.constant 0 : i32
    %c0_i32_1 = arith.constant 0 : i32
    %c0_i32_2 = arith.constant 0 : i32
    return %c0_i32, %c0_i32_0, %c0_i32_1 : i32, i32, i32
  }
  func.func @transform_8(%arg0: i32) -> (i32, i32, i32) {
    %c0_i32 = arith.constant 0 : i32
    %c0_i32_0 = arith.constant 0 : i32
    %c0_i32_1 = arith.constant 0 : i32
    %c0_i32_2 = arith.constant 0 : i32
    return %c0_i32, %c0_i32_0, %c0_i32_1 : i32, i32, i32
  }
  func.func @transform_9(%arg0: i32) -> (i32, i32, i32) {
    %c0_i32 = arith.constant 0 : i32
    %c0_i32_0 = arith.constant 0 : i32
    %c0_i32_1 = arith.constant 0 : i32
    %c0_i32_2 = arith.constant 0 : i32
    return %c0_i32, %c0_i32_0, %c0_i32_1 : i32, i32, i32
  }
  func.func @transform_10(%arg0: i32) -> (i32, i32, i32) {
    %c0_i32 = arith.constant 0 : i32
    %c0_i32_0 = arith.constant 0 : i32
    %c0_i32_1 = arith.constant 0 : i32
    return %arg0, %c0_i32, %c0_i32_0 : i32, i32, i32
  }
}

</mosaic_0001>

<llo_original>
// kernel: tpu_custom_call.1
$region0: #{tpu_custom_call.1}
  #allocation0 [shape = 'u32[]', space=smem, size = 0x4, offset = 0x4, fixed_abs, tag = 'smem constant byte address 0x4 - core index']
  #allocation1 [shape = 'u32[144,128]{1,0:T(1,128)}', space=vmem, size = 0x12000, scoped, tag = 'internal scratch']
  #allocation2 [shape = 'f32[100,256]{1,0:T(8,128)}', space=vmem, size = 0x1a000, scoped, tag = 'scratch operand']
  #allocation3 [shape = 'f32[36,256]{1,0:T(8,128)}', space=vmem, size = 0xa000, scoped, tag = 'scratch operand']
  %s0 = inlined_call_operand.vmem [shape: f32[2,4,256], index: 0, kind: input, shape index: {}]
  %s1 = inlined_call_operand.vmem [shape: bf16[4,100], index: 1, kind: input, shape index: {}]
  %s2 = inlined_call_operand.vmem [shape: f32[4,1], index: 2, kind: input, shape index: {}]
  %s3 = inlined_call_operand.vmem [shape: bf16[8,36], index: 3, kind: input, shape index: {}]
  %s4 = inlined_call_operand.vmem [shape: f32[8,1], index: 4, kind: input, shape index: {}]
  %s5 = inlined_call_operand.vmem [shape: bf16[256,64], index: 5, kind: input, shape index: {}]
  %s6 = inlined_call_operand.vmem [shape: bf16[64,16], index: 6, kind: input, shape index: {}]
  %s7 = inlined_call_operand.vmem [shape: f32[25,1,256], index: 7, kind: input, shape index: {}]
  %s8 = inlined_call_operand.vmem [shape: f32[9,1,256], index: 8, kind: input, shape index: {}]
  %s9 = inlined_call_operand.vmem [shape: f32[9,1,64], index: 9, kind: input, shape index: {}]
  %s10 = inlined_call_operand.hbm [shape: f32[2,8,16], index: 10, kind: output, shape index: {}]
  %s11 = sld [smem:[#allocation0]]
  $region73: #{tpu_custom_call.1} parent=0
    _
  %s13 = ssub.s32 1, %s11
  %s14 = scalar_select 0, %s13, %s11
  $region1: #{tpu_custom_call.1} parent=0
    #allocation4 [shape = 'u8[8192]{0}', space=vmem, size = 0x2000, scoped, tag = 'output window, operand 0']
    #allocation5 [shape = 's32[2]{0}', space=sflag, size = 0x8, scoped, tag = 'scoped memory for tpu_custom_call.1']
    %15 = vsyncpa [#allocation5], 0
    %s16 = scalar_lea.sflag [#allocation5], 1
    %17 = vsyncpa %s16, 0
    loop: start=0, step=1, limit=4
    $region2: #{tpu_custom_call.1} parent=1 // loop_pre_header
      _
    $region3: #{tpu_custom_call.1} parent=1 // loop_header
      %s19 = sphi 0, %s23
      %p20 = scmp.ge.s32.totalorder %s19, 4
      %s29 = sphi 0, %s31
      %s32 = sphi 0, %s29
      %s33 = sphi 0, %s32
      %s49 = sphi 0, %s33
      %s53 = sphi 0, %s53
      %s55 = sphi 0, %s53
      %s56 = sphi 0, %s55
      %s70 = sphi 0, %s56
      %s74 = sphi 0, %s74
      %s76 = sphi 0, %s74
      %s77 = sphi 0, %s76
      %s91 = sphi 0, %s77
      %s95 = sphi 0, %s95
      %s97 = sphi 0, %s95
      %s98 = sphi 0, %s97
      %s112 = sphi 0, %s98
      %s116 = sphi 0, %s116
      %s118 = sphi 0, %s116
      %s119 = sphi 0, %s118
      %s133 = sphi 0, %s119
      %s137 = sphi 0, %s137
      %s139 = sphi 0, %s137
      %s140 = sphi 0, %s139
      %s154 = sphi 0, %s140
      %s158 = sphi 0, %s158
      %s160 = sphi 0, %s158
      %s161 = sphi 0, %s160
      %s175 = sphi 0, %s161
      %s179 = sphi 0, %s179
      %s181 = sphi 0, %s179
      %s182 = sphi 0, %s181
      %s196 = sphi 0, %s182
      %s200 = sphi 0, %s200
      %s202 = sphi 0, %s200
      %s203 = sphi 0, %s202
      %s217 = sphi 0, %s203
      %s221 = sphi 0, %s221
      %s223 = sphi 0, %s221
      %s224 = sphi 0, %s223
      %s238 = sphi 0, %s224
      %s244 = sphi 0, %s246
      %s247 = sphi 0, %s244
      %s248 = sphi 0, %s247
      %s264 = sphi 0, %s248
    $region4: #{tpu_custom_call.1} parent=1 // loop_header_branch
      %22 = sbr.rel (%p20) target = $region8
    $region5: #{tpu_custom_call.1} parent=1 // loop_body
      %s24 = ssub.s32 %s19, 1
      %s25 = ssub.s32 %s19, 2
      %s26 = sadd.s32 %s19, 1
      %s27 = ssub.s32 %s19, %s26
      %p28 = scmp.eq.s32.totalorder %s27, 0
      %s30 = sadd.s32 %s29, 1
      %s31 = scalar_select %p28, %s29, %s30
      %p34 = pneg %p28
      %p35 = scmp.eq.s32.totalorder %s19, 1
      %p36 = por %p34, %p35
      %p37 = scmp.ne.s32.totalorder %s29, %s32
      %p38 = scmp.eq.s32.totalorder %s19, 0
      %p39 = por %p37, %p38
      %p40 = scmp.ne.s32.totalorder %s29, %s32
      %p41 = scmp.eq.s32.totalorder %s24, 1
      %p42 = por %p40, %p41
      %p43 = scmp.ne.s32.totalorder %s32, %s33
      %p44 = scmp.eq.s32.totalorder %s24, 0
      %p45 = por %p43, %p44
      %p46 = scmp.ne.s32.totalorder %s32, %s33
      %p47 = scmp.eq.s32.totalorder %s25, 1
      %p48 = por %p46, %p47
      %p50 = scmp.ne.s32.totalorder %s33, %s49
      %p51 = scmp.eq.s32.totalorder %s25, 0
      %p52 = por %p50, %p51
      %s54 = sadd.s32 %s53, 1
      %p57 = scmp.eq.s32.totalorder %s19, 1
      %p58 = scmp.ne.s32.totalorder %s53, %s55
      %p59 = scmp.eq.s32.totalorder %s19, 0
      %p60 = por %p58, %p59
      %p61 = scmp.ne.s32.totalorder %s53, %s55
      %p62 = scmp.eq.s32.totalorder %s24, 1
      %p63 = por %p61, %p62
      %p64 = scmp.ne.s32.totalorder %s55, %s56
      %p65 = scmp.eq.s32.totalorder %s24, 0
      %p66 = por %p64, %p65
      %p67 = scmp.ne.s32.totalorder %s55, %s56
      %p68 = scmp.eq.s32.totalorder %s25, 1
      %p69 = por %p67, %p68
      %p71 = scmp.ne.s32.totalorder %s56, %s70
      %p72 = scmp.eq.s32.totalorder %s25, 0
      %p73 = por %p71, %p72
      %s75 = sadd.s32 %s74, 1
      %p78 = scmp.eq.s32.totalorder %s19, 1
      %p79 = scmp.ne.s32.totalorder %s74, %s76
      %p80 = scmp.eq.s32.totalorder %s19, 0
      %p81 = por %p79, %p80
      %p82 = scmp.ne.s32.totalorder %s74, %s76
      %p83 = scmp.eq.s32.totalorder %s24, 1
      %p84 = por %p82, %p83
      %p85 = scmp.ne.s32.totalorder %s76, %s77
      %p86 = scmp.eq.s32.totalorder %s24, 0
      %p87 = por %p85, %p86
      %p88 = scmp.ne.s32.totalorder %s76, %s77
      %p89 = scmp.eq.s32.totalorder %s25, 1
      %p90 = por %p88, %p89
      %p92 = scmp.ne.s32.totalorder %s77, %s91
      %p93 = scmp.eq.s32.totalorder %s25, 0
      %p94 = por %p92, %p93
      %s96 = sadd.s32 %s95, 1
      %p99 = scmp.eq.s32.totalorder %s19, 1
      %p100 = scmp.ne.s32.totalorder %s95, %s97
      %p101 = scmp.eq.s32.totalorder %s19, 0
      %p102 = por %p100, %p101
      %p103 = scmp.ne.s32.totalorder %s95, %s97
      %p104 = scmp.eq.s32.totalorder %s24, 1
      %p105 = por %p103, %p104
      %p106 = scmp.ne.s32.totalorder %s97, %s98
      %p107 = scmp.eq.s32.totalorder %s24, 0
      %p108 = por %p106, %p107
      %p109 = scmp.ne.s32.totalorder %s97, %s98
      %p110 = scmp.eq.s32.totalorder %s25, 1
      %p111 = por %p109, %p110
      %p113 = scmp.ne.s32.totalorder %s98, %s112
      %p114 = scmp.eq.s32.totalorder %s25, 0
      %p115 = por %p113, %p114
      %s117 = sadd.s32 %s116, 1
      %p120 = scmp.eq.s32.totalorder %s19, 1
      %p121 = scmp.ne.s32.totalorder %s116, %s118
      %p122 = scmp.eq.s32.totalorder %s19, 0
      %p123 = por %p121, %p122
      %p124 = scmp.ne.s32.totalorder %s116, %s118
      %p125 = scmp.eq.s32.totalorder %s24, 1
      %p126 = por %p124, %p125
      %p127 = scmp.ne.s32.totalorder %s118, %s119
      %p128 = scmp.eq.s32.totalorder %s24, 0
      %p129 = por %p127, %p128
      %p130 = scmp.ne.s32.totalorder %s118, %s119
      %p131 = scmp.eq.s32.totalorder %s25, 1
      %p132 = por %p130, %p131
      %p134 = scmp.ne.s32.totalorder %s119, %s133
      %p135 = scmp.eq.s32.totalorder %s25, 0
      %p136 = por %p134, %p135
      %s138 = sadd.s32 %s137, 1
      %p141 = scmp.eq.s32.totalorder %s19, 1
      %p142 = scmp.ne.s32.totalorder %s137, %s139
      %p143 = scmp.eq.s32.totalorder %s19, 0
      %p144 = por %p142, %p143
      %p145 = scmp.ne.s32.totalorder %s137, %s139
      %p146 = scmp.eq.s32.totalorder %s24, 1
      %p147 = por %p145, %p146
      %p148 = scmp.ne.s32.totalorder %s139, %s140
      %p149 = scmp.eq.s32.totalorder %s24, 0
      %p150 = por %p148, %p149
      %p151 = scmp.ne.s32.totalorder %s139, %s140
      %p152 = scmp.eq.s32.totalorder %s25, 1
      %p153 = por %p151, %p152
      %p155 = scmp.ne.s32.totalorder %s140, %s154
      %p156 = scmp.eq.s32.totalorder %s25, 0
      %p157 = por %p155, %p156
      %s159 = sadd.s32 %s158, 1
      %p162 = scmp.eq.s32.totalorder %s19, 1
      %p163 = scmp.ne.s32.totalorder %s158, %s160
      %p164 = scmp.eq.s32.totalorder %s19, 0
      %p165 = por %p163, %p164
      %p166 = scmp.ne.s32.totalorder %s158, %s160
      %p167 = scmp.eq.s32.totalorder %s24, 1
      %p168 = por %p166, %p167
      %p169 = scmp.ne.s32.totalorder %s160, %s161
      %p170 = scmp.eq.s32.totalorder %s24, 0
      %p171 = por %p169, %p170
      %p172 = scmp.ne.s32.totalorder %s160, %s161
      %p173 = scmp.eq.s32.totalorder %s25, 1
      %p174 = por %p172, %p173
      %p176 = scmp.ne.s32.totalorder %s161, %s175
      %p177 = scmp.eq.s32.totalorder %s25, 0
      %p178 = por %p176, %p177
      %s180 = sadd.s32 %s179, 1
      %p183 = scmp.eq.s32.totalorder %s19, 1
      %p184 = scmp.ne.s32.totalorder %s179, %s181
      %p185 = scmp.eq.s32.totalorder %s19, 0
      %p186 = por %p184, %p185
      %p187 = scmp.ne.s32.totalorder %s179, %s181
      %p188 = scmp.eq.s32.totalorder %s24, 1
      %p189 = por %p187, %p188
      %p190 = scmp.ne.s32.totalorder %s181, %s182
      %p191 = scmp.eq.s32.totalorder %s24, 0
      %p192 = por %p190, %p191
      %p193 = scmp.ne.s32.totalorder %s181, %s182
      %p194 = scmp.eq.s32.totalorder %s25, 1
      %p195 = por %p193, %p194
      %p197 = scmp.ne.s32.totalorder %s182, %s196
      %p198 = scmp.eq.s32.totalorder %s25, 0
      %p199 = por %p197, %p198
      %s201 = sadd.s32 %s200, 1
      %p204 = scmp.eq.s32.totalorder %s19, 1
      %p205 = scmp.ne.s32.totalorder %s200, %s202
      %p206 = scmp.eq.s32.totalorder %s19, 0
      %p207 = por %p205, %p206
      %p208 = scmp.ne.s32.totalorder %s200, %s202
      %p209 = scmp.eq.s32.totalorder %s24, 1
      %p210 = por %p208, %p209
      %p211 = scmp.ne.s32.totalorder %s202, %s203
      %p212 = scmp.eq.s32.totalorder %s24, 0
      %p213 = por %p211, %p212
      %p214 = scmp.ne.s32.totalorder %s202, %s203
      %p215 = scmp.eq.s32.totalorder %s25, 1
      %p216 = por %p214, %p215
      %p218 = scmp.ne.s32.totalorder %s203, %s217
      %p219 = scmp.eq.s32.totalorder %s25, 0
      %p220 = por %p218, %p219
      %s222 = sadd.s32 %s221, 1
      %p225 = scmp.eq.s32.totalorder %s19, 1
      %p226 = scmp.ne.s32.totalorder %s221, %s223
      %p227 = scmp.eq.s32.totalorder %s19, 0
      %p228 = por %p226, %p227
      %p229 = scmp.ne.s32.totalorder %s221, %s223
      %p230 = scmp.eq.s32.totalorder %s24, 1
      %p231 = por %p229, %p230
      %p232 = scmp.ne.s32.totalorder %s223, %s224
      %p233 = scmp.eq.s32.totalorder %s24, 0
      %p234 = por %p232, %p233
      %p235 = scmp.ne.s32.totalorder %s223, %s224
      %p236 = scmp.eq.s32.totalorder %s25, 1
      %p237 = por %p235, %p236
      %p239 = scmp.ne.s32.totalorder %s224, %s238
      %p240 = scmp.eq.s32.totalorder %s25, 0
      %p241 = por %p239, %p240
      %s242 = ssub.s32 %s19, %s26
      %p243 = scmp.eq.s32.totalorder %s242, 0
      %s245 = sadd.s32 %s244, 1
      %s246 = scalar_select %p243, %s244, %s245
      %p249 = pneg %p243
      %p250 = scmp.eq.s32.totalorder %s19, 1
      %p251 = por %p249, %p250
      %p252 = scmp.ne.s32.totalorder %s244, %s247
      %p253 = scmp.eq.s32.totalorder %s19, 0
      %p254 = por %p252, %p253
      %p255 = scmp.ne.s32.totalorder %s244, %s247
      %p256 = scmp.eq.s32.totalorder %s24, 1
      %p257 = por %p255, %p256
      %p258 = scmp.ne.s32.totalorder %s247, %s248
      %p259 = scmp.eq.s32.totalorder %s24, 0
      %p260 = por %p258, %p259
      %p261 = scmp.ne.s32.totalorder %s247, %s248
      %p262 = scmp.eq.s32.totalorder %s25, 1
      %p263 = por %p261, %p262
      %p265 = scmp.ne.s32.totalorder %s248, %s264
      %p266 = scmp.eq.s32.totalorder %s25, 0
      %p267 = por %p265, %p266
      %p268 = scmp.le.s32.totalorder 1, %s19
      %p269 = scmp.lt.s32.totalorder %s19, 3
      %p270 = pnand %p268, %p269
      %p271 = pneg %p270
      // Predicated region
      $region9: #{tpu_custom_call.1} parent=5 // pred_check
        _
      $region10: #{tpu_custom_call.1} parent=5 // pred_check_branch
        %273 = sbr.rel (%p270) target = $region12
      $region11: #{tpu_custom_call.1} parent=5 // pred_region
        %s274 = ssub.s32 %s19, 1
        // Predicated region
        $region13: #{tpu_custom_call.1} parent=11 // pred_check
          %p275 = pneg %p66
        $region14: #{tpu_custom_call.1} parent=11 // pred_check_branch
          %277 = sbr.rel (%p275) target = $region16
        $region15: #{tpu_custom_call.1} parent=11 // pred_region
          _
        $region16: #{tpu_custom_call.1} parent=11 // pred_fallthru
          _
        // Predicated region
        $region17: #{tpu_custom_call.1} parent=11 // pred_check
          %p278 = pneg %p87
        $region18: #{tpu_custom_call.1} parent=11 // pred_check_branch
          %280 = sbr.rel (%p278) target = $region20
        $region19: #{tpu_custom_call.1} parent=11 // pred_region
          _
        $region20: #{tpu_custom_call.1} parent=11 // pred_fallthru
          _
        // Predicated region
        $region21: #{tpu_custom_call.1} parent=11 // pred_check
          %p281 = pneg %p108
        $region22: #{tpu_custom_call.1} parent=11 // pred_check_branch
          %283 = sbr.rel (%p281) target = $region24
        $region23: #{tpu_custom_call.1} parent=11 // pred_region
          _
        $region24: #{tpu_custom_call.1} parent=11 // pred_fallthru
          _
        // Predicated region
        $region25: #{tpu_custom_call.1} parent=11 // pred_check
          %p284 = pneg %p129
        $region26: #{tpu_custom_call.1} parent=11 // pred_check_branch
          %286 = sbr.rel (%p284) target = $region28
        $region27: #{tpu_custom_call.1} parent=11 // pred_region
          _
        $region28: #{tpu_custom_call.1} parent=11 // pred_fallthru
          _
        // Predicated region
        $region29: #{tpu_custom_call.1} parent=11 // pred_check
          %p287 = pneg %p150
        $region30: #{tpu_custom_call.1} parent=11 // pred_check_branch
          %289 = sbr.rel (%p287) target = $region32
        $region31: #{tpu_custom_call.1} parent=11 // pred_region
          _
        $region32: #{tpu_custom_call.1} parent=11 // pred_fallthru
          _
        // Predicated region
        $region33: #{tpu_custom_call.1} parent=11 // pred_check
          %p290 = pneg %p171
        $region34: #{tpu_custom_call.1} parent=11 // pred_check_branch
          %292 = sbr.rel (%p290) target = $region36
        $region35: #{tpu_custom_call.1} parent=11 // pred_region
          _
        $region36: #{tpu_custom_call.1} parent=11 // pred_fallthru
          _
        // Predicated region
        $region37: #{tpu_custom_call.1} parent=11 // pred_check
          %p293 = pneg %p192
        $region38: #{tpu_custom_call.1} parent=11 // pred_check_branch
          %295 = sbr.rel (%p293) target = $region40
        $region39: #{tpu_custom_call.1} parent=11 // pred_region
          _
        $region40: #{tpu_custom_call.1} parent=11 // pred_fallthru
          _
        // Predicated region
        $region41: #{tpu_custom_call.1} parent=11 // pred_check
          %p296 = pneg %p213
        $region42: #{tpu_custom_call.1} parent=11 // pred_check_branch
          %298 = sbr.rel (%p296) target = $region44
        $region43: #{tpu_custom_call.1} parent=11 // pred_region
          _
        $region44: #{tpu_custom_call.1} parent=11 // pred_fallthru
          _
        // Predicated region
        $region45: #{tpu_custom_call.1} parent=11 // pred_check
          %p299 = pneg %p234
        $region46: #{tpu_custom_call.1} parent=11 // pred_check_branch
          %301 = sbr.rel (%p299) target = $region48
        $region47: #{tpu_custom_call.1} parent=11 // pred_region
          _
        $region48: #{tpu_custom_call.1} parent=11 // pred_fallthru
          _
      $region12: #{tpu_custom_call.1} parent=5 // pred_fallthru
        _
      %p302 = scmp.lt.s32.totalorder %s19, 2
      // Predicated region
      $region49: #{tpu_custom_call.1} parent=5 // pred_check
        %p303 = pneg %p302
      $region50: #{tpu_custom_call.1} parent=5 // pred_check_branch
        %305 = sbr.rel (%p303) target = $region52
      $region51: #{tpu_custom_call.1} parent=5 // pred_region
        // Predicated region
        $region53: #{tpu_custom_call.1} parent=51 // pred_check
          %p306 = pneg %p39
        $region54: #{tpu_custom_call.1} parent=51 // pred_check_branch
          %308 = sbr.rel (%p306) target = $region56
        $region55: #{tpu_custom_call.1} parent=51 // pred_region
          %p309 = scmp.lt.s32.totalorder %s19, 1
          %s310 = scalar_select %p309, %s19, 1
          %s311 = smul.addr %s310, 2
          %s312 = smul.addr %s311, 4
          %s313 = scalar_lea.vmem %s0, %s312
        $region56: #{tpu_custom_call.1} parent=51 // pred_fallthru
          _
      $region52: #{tpu_custom_call.1} parent=5 // pred_fallthru
        _
      %p314 = scmp.le.s32.totalorder 1, %s19
      %p315 = scmp.lt.s32.totalorder %s19, 3
      %p316 = pnand %p314, %p315
      %p317 = pneg %p316
      // Predicated region
      $region57: #{tpu_custom_call.1} parent=5 // pred_check
        _
      $region58: #{tpu_custom_call.1} parent=5 // pred_check_branch
        %319 = sbr.rel (%p316) target = $region60
      $region59: #{tpu_custom_call.1} parent=5 // pred_region
        %s320 = ssub.s32 %s19, 1
        %p321 = scmp.lt.s32.totalorder %s24, 1
        %s322 = scalar_select %p321, %s24, 1
        %s323 = smul.addr %s322, 2
        %s324 = smul.addr %s323, 4
        %s325 = scalar_lea.vmem %s0, %s324
        %p326 = pneg %p45
        %p327 = pneg %p42
        %p328 = pneg %p66
        %p329 = pneg %p63
        %p330 = pneg %p87
        %p331 = pneg %p84
        %p332 = pneg %p108
        %p333 = pneg %p105
        %p334 = pneg %p129
        %p335 = pneg %p126
        %p336 = pneg %p150
        %p337 = pneg %p147
        %p338 = pneg %p171
        %p339 = pneg %p168
        %p340 = pneg %p192
        %p341 = pneg %p189
        %p342 = pneg %p213
        %p343 = pneg %p210
        %p344 = pneg %p234
        %p345 = pneg %p231
        %p346 = pneg %p260
        %p347 = pneg %p257
        %s348 = sand.u32 %s247, 1
        %s349 = scalar_lea.sflag [#allocation5], %s348
        %s350 = sand.u32 %s247, 1
        %s351 = smul.addr %s350, 8
        %s352 = scalar_lea.vmem [#allocation4], %s351
        %p353 = scmp.lt.s32.totalorder %s24, 1
        %s354 = scalar_select %p353, %s24, 1
        %s355 = smul.addr %s354, 2
        %s356 = smul.addr %s355, 4
        %s357 = scalar_lea.vmem %s0, %s356
        %v359 = vld [vmem:[%s1] sm:$0x3]
        %v360 = vld [vmem:[%s3] sm:$0xf]
        %v361 = vld [vmem:[%s2] sm:$0xf]
        %v362 = vld [vmem:[%s4] sm:$0xff]
        %v363 = vld [vmem:[%s5] sm:$0xf]
        %v364 = vld [vmem:[%s5 + $0x4] sm:$0xf]
        %v365 = vld [vmem:[%s5 + $0x8] sm:$0xf]
        %v366 = vld [vmem:[%s5 + $0xc] sm:$0xf]
        %v367 = vld [vmem:[%s5 + $0x10] sm:$0xf]
        %v368 = vld [vmem:[%s5 + $0x14] sm:$0xf]
        %v369 = vld [vmem:[%s5 + $0x18] sm:$0xf]
        %v370 = vld [vmem:[%s5 + $0x1c] sm:$0xf]
        %v371 = vld [vmem:[%s5 + $0x20] sm:$0xf]
        %v372 = vld [vmem:[%s5 + $0x24] sm:$0xf]
        %v373 = vld [vmem:[%s5 + $0x28] sm:$0xf]
        %v374 = vld [vmem:[%s5 + $0x2c] sm:$0xf]
        %v375 = vld [vmem:[%s5 + $0x30] sm:$0xf]
        %v376 = vld [vmem:[%s5 + $0x34] sm:$0xf]
        %v377 = vld [vmem:[%s5 + $0x38] sm:$0xf]
        %v378 = vld [vmem:[%s5 + $0x3c] sm:$0xf]
        %v379 = vld [vmem:[%s5 + $0x40] sm:$0xf]
        %v380 = vld [vmem:[%s5 + $0x44] sm:$0xf]
        %v381 = vld [vmem:[%s5 + $0x48] sm:$0xf]
        %v382 = vld [vmem:[%s5 + $0x4c] sm:$0xf]
        %v383 = vld [vmem:[%s5 + $0x50] sm:$0xf]
        %v384 = vld [vmem:[%s5 + $0x54] sm:$0xf]
        %v385 = vld [vmem:[%s5 + $0x58] sm:$0xf]
        %v386 = vld [vmem:[%s5 + $0x5c] sm:$0xf]
        %v387 = vld [vmem:[%s5 + $0x60] sm:$0xf]
        %v388 = vld [vmem:[%s5 + $0x64] sm:$0xf]
        %v389 = vld [vmem:[%s5 + $0x68] sm:$0xf]
        %v390 = vld [vmem:[%s5 + $0x6c] sm:$0xf]
        %v391 = vld [vmem:[%s5 + $0x70] sm:$0xf]
        %v392 = vld [vmem:[%s5 + $0x74] sm:$0xf]
        %v393 = vld [vmem:[%s5 + $0x78] sm:$0xf]
        %v394 = vld [vmem:[%s5 + $0x7c] sm:$0xf]
        %v395 = vld [vmem:[%s6] sm:$0xf]
        %v396 = vld [vmem:[%s6 + $0x4] sm:$0xf]
        %v397 = vld [vmem:[%s6 + $0x8] sm:$0xf]
        %v398 = vld [vmem:[%s6 + $0xc] sm:$0xf]
        %v399 = vld [vmem:[%s6 + $0x10] sm:$0xf]
        %v400 = vld [vmem:[%s6 + $0x14] sm:$0xf]
        %v401 = vld [vmem:[%s6 + $0x18] sm:$0xf]
        %v402 = vld [vmem:[%s6 + $0x1c] sm:$0xf]
        %v403 = vld [vmem:[%s357] sm:$0xff]
        %v405 = vcombine.high %v403, %v403
        %406 = vrot.lane.b32.xlu0 %v405, 34
        %v407 = vpop.permute.xlu0 %406
        %409 = vrot.lane.b32.xlu0 %v403, 34
        %v410 = vpop.permute.xlu0 %409
        %vm411 = vcmask 277504
        %v412 = vsel %vm411, %v410, %v407
        %v415 = vsel %vm411, %v407, %v410
        %v416 = vld [vmem:[%s7] sm:$0x3]
        %v418 = vlaneseq
        %v419 = vshrl.u32 %v418, 7
        %v420 = vsub.s32 0, %v419
        %v421 = vrot.slane %v416, %v420
        %v422 = vlaneseq
        %v423 = vshrl.u32 %v422, 7
        %v424 = vsub.s32 1, %v423
        %v425 = vrot.slane %v416, %v424
        %v428 = vmul.f32 %v415, %v421
        %v429 = vmul.f32 %v412, %v425
        %430 = vst [vmem:[#allocation2] sm:$0xf] %v428
        %431 = vst [vmem:[#allocation2 + $0x8] sm:$0xf] %v429
        %432 = vrot.lane.b32.xlu0 %v405, 33
        %v433 = vpop.permute.xlu0 %432
        %435 = vrot.lane.b32.xlu0 %v403, 33
        %v436 = vpop.permute.xlu0 %435
        %vm437 = vcmask 269312
        %v438 = vsel %vm437, %v436, %v433
        %v441 = vsel %vm437, %v433, %v436
        %s442 = scalar_lea.vmem %s7, 2
        %v443 = vld [vmem:[%s442] sm:$0x3]
        %v445 = vlaneseq
        %v446 = vshrl.u32 %v445, 7
        %v447 = vsub.s32 0, %v446
        %v448 = vrot.slane %v443, %v447
        %v449 = vlaneseq
        %v450 = vshrl.u32 %v449, 7
        %v451 = vsub.s32 1, %v450
        %v452 = vrot.slane %v443, %v451
        %v455 = vmul.f32 %v441, %v448
        %v456 = vmul.f32 %v438, %v452
        %v459 = vrot.slane %v455, 4
        %v460 = vrot.slane %v456, 4
        %463 = vst [vmem:[#allocation2] sm:$0xf0] %v459
        %464 = vst [vmem:[#allocation2 + $0x8] sm:$0xf0] %v460
        %465 = vrot.lane.b32.xlu0 %v405, 32
        %v466 = vpop.permute.xlu0 %465
        %468 = vrot.lane.b32.xlu0 %v403, 32
        %v469 = vpop.permute.xlu0 %468
        %vm470 = vcmask 261120
        %v471 = vsel %vm470, %v469, %v466
        %v474 = vsel %vm470, %v466, %v469
        %s475 = scalar_lea.vmem %s7, 4
        %v476 = vld [vmem:[%s475] sm:$0x3]
        %v478 = vlaneseq
        %v479 = vshrl.u32 %v478, 7
        %v480 = vsub.s32 0, %v479
        %v481 = vrot.slane %v476, %v480
        %v482 = vlaneseq
        %v483 = vshrl.u32 %v482, 7
        %v484 = vsub.s32 1, %v483
        %v485 = vrot.slane %v476, %v484
        %v488 = vmul.f32 %v474, %v481
        %v489 = vmul.f32 %v471, %v485
        %490 = vst [vmem:[#allocation2 + $0x10] sm:$0xf] %v488
        %491 = vst [vmem:[#allocation2 + $0x18] sm:$0xf] %v489
        %492 = vrot.lane.b32.xlu0 %v405, 31
        %v493 = vpop.permute.xlu0 %492
        %495 = vrot.lane.b32.xlu0 %v403, 31
        %v496 = vpop.permute.xlu0 %495
        %vm497 = vcmask 252928
        %v498 = vsel %vm497, %v496, %v493
        %v501 = vsel %vm497, %v493, %v496
        %s502 = scalar_lea.vmem %s7, 6
        %v503 = vld [vmem:[%s502] sm:$0x3]
        %v505 = vlaneseq
        %v506 = vshrl.u32 %v505, 7
        %v507 = vsub.s32 0, %v506
        %v508 = vrot.slane %v503, %v507
        %v509 = vlaneseq
        %v510 = vshrl.u32 %v509, 7
        %v511 = vsub.s32 1, %v510
        %v512 = vrot.slane %v503, %v511
        %v515 = vmul.f32 %v501, %v508
        %v516 = vmul.f32 %v498, %v512
        %v519 = vrot.slane %v515, 4
        %v520 = vrot.slane %v516, 4
        %523 = vst [vmem:[#allocation2 + $0x10] sm:$0xf0] %v519
        %524 = vst [vmem:[#allocation2 + $0x18] sm:$0xf0] %v520
        %525 = vrot.lane.b32.xlu0 %v405, 30
        %v526 = vpop.permute.xlu0 %525
        %528 = vrot.lane.b32.xlu0 %v403, 30
        %v529 = vpop.permute.xlu0 %528
        %vm530 = vcmask 244736
        %v531 = vsel %vm530, %v529, %v526
        %v534 = vsel %vm530, %v526, %v529
        %s535 = scalar_lea.vmem %s7, 8
        %v536 = vld [vmem:[%s535] sm:$0x3]
        %v538 = vlaneseq
        %v539 = vshrl.u32 %v538, 7
        %v540 = vsub.s32 0, %v539
        %v541 = vrot.slane %v536, %v540
        %v542 = vlaneseq
        %v543 = vshrl.u32 %v542, 7
        %v544 = vsub.s32 1, %v543
        %v545 = vrot.slane %v536, %v544
        %v548 = vmul.f32 %v534, %v541
        %v549 = vmul.f32 %v531, %v545
        %550 = vst [vmem:[#allocation2 + $0x20] sm:$0xf] %v548
        %551 = vst [vmem:[#allocation2 + $0x28] sm:$0xf] %v549
        %552 = vrot.lane.b32.xlu0 %v405, 18
        %v553 = vpop.permute.xlu0 %552
        %555 = vrot.lane.b32.xlu0 %v403, 18
        %v556 = vpop.permute.xlu0 %555
        %vm557 = vcmask 146432
        %v558 = vsel %vm557, %v556, %v553
        %v561 = vsel %vm557, %v553, %v556
        %s562 = scalar_lea.vmem %s7, 10
        %v563 = vld [vmem:[%s562] sm:$0x3]
        %v565 = vlaneseq
        %v566 = vshrl.u32 %v565, 7
        %v567 = vsub.s32 0, %v566
        %v568 = vrot.slane %v563, %v567
        %v569 = vlaneseq
        %v570 = vshrl.u32 %v569, 7
        %v571 = vsub.s32 1, %v570
        %v572 = vrot.slane %v563, %v571
        %v575 = vmul.f32 %v561, %v568
        %v576 = vmul.f32 %v558, %v572
        %v579 = vrot.slane %v575, 4
        %v580 = vrot.slane %v576, 4
        %583 = vst [vmem:[#allocation2 + $0x20] sm:$0xf0] %v579
        %584 = vst [vmem:[#allocation2 + $0x28] sm:$0xf0] %v580
        %585 = vrot.lane.b32.xlu0 %v405, 17
        %v586 = vpop.permute.xlu0 %585
        %588 = vrot.lane.b32.xlu0 %v403, 17
        %v589 = vpop.permute.xlu0 %588
        %vm590 = vcmask 138240
        %v591 = vsel %vm590, %v589, %v586
        %v594 = vsel %vm590, %v586, %v589
        %s595 = scalar_lea.vmem %s7, 12
        %v596 = vld [vmem:[%s595] sm:$0x3]
        %v598 = vlaneseq
        %v599 = vshrl.u32 %v598, 7
        %v600 = vsub.s32 0, %v599
        %v601 = vrot.slane %v596, %v600
        %v602 = vlaneseq
        %v603 = vshrl.u32 %v602, 7
        %v604 = vsub.s32 1, %v603
        %v605 = vrot.slane %v596, %v604
        %v608 = vmul.f32 %v594, %v601
        %v609 = vmul.f32 %v591, %v605
        %610 = vst [vmem:[#allocation2 + $0x30] sm:$0xf] %v608
        %611 = vst [vmem:[#allocation2 + $0x38] sm:$0xf] %v609
        %612 = vrot.lane.b32.xlu0 %v405, 16
        %v613 = vpop.permute.xlu0 %612
        %615 = vrot.lane.b32.xlu0 %v403, 16
        %v616 = vpop.permute.xlu0 %615
        %vm617 = vcmask 130048
        %v618 = vsel %vm617, %v616, %v613
        %v621 = vsel %vm617, %v613, %v616
        %s622 = scalar_lea.vmem %s7, 14
        %v623 = vld [vmem:[%s622] sm:$0x3]
        %v625 = vlaneseq
        %v626 = vshrl.u32 %v625, 7
        %v627 = vsub.s32 0, %v626
        %v628 = vrot.slane %v623, %v627
        %v629 = vlaneseq
        %v630 = vshrl.u32 %v629, 7
        %v631 = vsub.s32 1, %v630
        %v632 = vrot.slane %v623, %v631
        %v635 = vmul.f32 %v621, %v628
        %v636 = vmul.f32 %v618, %v632
        %v639 = vrot.slane %v635, 4
        %v640 = vrot.slane %v636, 4
        %643 = vst [vmem:[#allocation2 + $0x30] sm:$0xf0] %v639
        %644 = vst [vmem:[#allocation2 + $0x38] sm:$0xf0] %v640
        %645 = vrot.lane.b32.xlu0 %v405, 15
        %v646 = vpop.permute.xlu0 %645
        %648 = vrot.lane.b32.xlu0 %v403, 15
        %v649 = vpop.permute.xlu0 %648
        %vm650 = vcmask 121856
        %v651 = vsel %vm650, %v649, %v646
        %v654 = vsel %vm650, %v646, %v649
        %s655 = scalar_lea.vmem %s7, 16
        %v656 = vld [vmem:[%s655] sm:$0x3]
        %v658 = vlaneseq
        %v659 = vshrl.u32 %v658, 7
        %v660 = vsub.s32 0, %v659
        %v661 = vrot.slane %v656, %v660
        %v662 = vlaneseq
        %v663 = vshrl.u32 %v662, 7
        %v664 = vsub.s32 1, %v663
        %v665 = vrot.slane %v656, %v664
        %v668 = vmul.f32 %v654, %v661
        %v669 = vmul.f32 %v651, %v665
        %670 = vst [vmem:[#allocation2 + $0x40] sm:$0xf] %v668
        %671 = vst [vmem:[#allocation2 + $0x48] sm:$0xf] %v669
        %672 = vrot.lane.b32.xlu0 %v405, 14
        %v673 = vpop.permute.xlu0 %672
        %675 = vrot.lane.b32.xlu0 %v403, 14
        %v676 = vpop.permute.xlu0 %675
        %vm677 = vcmask 113664
        %v678 = vsel %vm677, %v676, %v673
        %v681 = vsel %vm677, %v673, %v676
        %s682 = scalar_lea.vmem %s7, 18
        %v683 = vld [vmem:[%s682] sm:$0x3]
        %v685 = vlaneseq
        %v686 = vshrl.u32 %v685, 7
        %v687 = vsub.s32 0, %v686
        %v688 = vrot.slane %v683, %v687
        %v689 = vlaneseq
        %v690 = vshrl.u32 %v689, 7
        %v691 = vsub.s32 1, %v690
        %v692 = vrot.slane %v683, %v691
        %v695 = vmul.f32 %v681, %v688
        %v696 = vmul.f32 %v678, %v692
        %v699 = vrot.slane %v695, 4
        %v700 = vrot.slane %v696, 4
        %703 = vst [vmem:[#allocation2 + $0x40] sm:$0xf0] %v699
        %704 = vst [vmem:[#allocation2 + $0x48] sm:$0xf0] %v700
        %705 = vrot.lane.b32.xlu0 %v405, 2
        %v706 = vpop.permute.xlu0 %705
        %708 = vrot.lane.b32.xlu0 %v403, 2
        %v709 = vpop.permute.xlu0 %708
        %vm710 = vcmask 15360
        %v711 = vsel %vm710, %v709, %v706
        %v714 = vsel %vm710, %v706, %v709
        %s715 = scalar_lea.vmem %s7, 20
        %v716 = vld [vmem:[%s715] sm:$0x3]
        %v718 = vlaneseq
        %v719 = vshrl.u32 %v718, 7
        %v720 = vsub.s32 0, %v719
        %v721 = vrot.slane %v716, %v720
        %v722 = vlaneseq
        %v723 = vshrl.u32 %v722, 7
        %v724 = vsub.s32 1, %v723
        %v725 = vrot.slane %v716, %v724
        %v728 = vmul.f32 %v714, %v721
        %v729 = vmul.f32 %v711, %v725
        %730 = vst [vmem:[#allocation2 + $0x50] sm:$0xf] %v728
        %731 = vst [vmem:[#allocation2 + $0x58] sm:$0xf] %v729
        %732 = vrot.lane.b32.xlu0 %v405, 1
        %v733 = vpop.permute.xlu0 %732
        %735 = vrot.lane.b32.xlu0 %v403, 1
        %v736 = vpop.permute.xlu0 %735
        %vm737 = vcmask 7168
        %v738 = vsel %vm737, %v736, %v733
        %v741 = vsel %vm737, %v733, %v736
        %s742 = scalar_lea.vmem %s7, 22
        %v743 = vld [vmem:[%s742] sm:$0x3]
        %v745 = vlaneseq
        %v746 = vshrl.u32 %v745, 7
        %v747 = vsub.s32 0, %v746
        %v748 = vrot.slane %v743, %v747
        %v749 = vlaneseq
        %v750 = vshrl.u32 %v749, 7
        %v751 = vsub.s32 1, %v750
        %v752 = vrot.slane %v743, %v751
        %v755 = vmul.f32 %v741, %v748
        %v756 = vmul.f32 %v738, %v752
        %v759 = vrot.slane %v755, 4
        %v760 = vrot.slane %v756, 4
        %763 = vst [vmem:[#allocation2 + $0x50] sm:$0xf0] %v759
        %764 = vst [vmem:[#allocation2 + $0x58] sm:$0xf0] %v760
        %766 = vst [vmem:[#allocation2 + $0x60] sm:$0xf] %v403
        %767 = vst [vmem:[#allocation2 + $0x68] sm:$0xf] %v405
        %768 = vrot.lane.b32.xlu0 %v403, 127
        %v769 = vpop.permute.xlu0 %768
        %770 = vrot.lane.b32.xlu0 %v405, 127
        %v771 = vpop.permute.xlu0 %770
        %vm772 = vcmask 1039360
        %v773 = vsel %vm772, %v769, %v771
        %v777 = vsel %vm772, %v771, %v769
        %s778 = scalar_lea.vmem %s7, 26
        %v779 = vld [vmem:[%s778] sm:$0x3]
        %v781 = vlaneseq
        %v782 = vshrl.u32 %v781, 7
        %v783 = vsub.s32 0, %v782
        %v784 = vrot.slane %v779, %v783
        %v785 = vlaneseq
        %v786 = vshrl.u32 %v785, 7
        %v787 = vsub.s32 1, %v786
        %v788 = vrot.slane %v779, %v787
        %v791 = vmul.f32 %v773, %v784
        %v792 = vmul.f32 %v777, %v788
        %v795 = vrot.slane %v791, 4
        %v796 = vrot.slane %v792, 4
        %799 = vst [vmem:[#allocation2 + $0x60] sm:$0xf0] %v795
        %800 = vst [vmem:[#allocation2 + $0x68] sm:$0xf0] %v796
        %801 = vrot.lane.b32.xlu0 %v403, 126
        %v802 = vpop.permute.xlu0 %801
        %803 = vrot.lane.b32.xlu0 %v405, 126
        %v804 = vpop.permute.xlu0 %803
        %vm805 = vcmask 1031168
        %v806 = vsel %vm805, %v802, %v804
        %v810 = vsel %vm805, %v804, %v802
        %s811 = scalar_lea.vmem %s7, 28
        %v812 = vld [vmem:[%s811] sm:$0x3]
        %v814 = vlaneseq
        %v815 = vshrl.u32 %v814, 7
        %v816 = vsub.s32 0, %v815
        %v817 = vrot.slane %v812, %v816
        %v818 = vlaneseq
        %v819 = vshrl.u32 %v818, 7
        %v820 = vsub.s32 1, %v819
        %v821 = vrot.slane %v812, %v820
        %v824 = vmul.f32 %v806, %v817
        %v825 = vmul.f32 %v810, %v821
        %826 = vst [vmem:[#allocation2 + $0x70] sm:$0xf] %v824
        %827 = vst [vmem:[#allocation2 + $0x78] sm:$0xf] %v825
        %828 = vrot.lane.b32.xlu0 %v403, 114
        %v829 = vpop.permute.xlu0 %828
        %830 = vrot.lane.b32.xlu0 %v405, 114
        %v831 = vpop.permute.xlu0 %830
        %vm832 = vcmask 932864
        %v833 = vsel %vm832, %v829, %v831
        %v837 = vsel %vm832, %v831, %v829
        %s838 = scalar_lea.vmem %s7, 30
        %v839 = vld [vmem:[%s838] sm:$0x3]
        %v841 = vlaneseq
        %v842 = vshrl.u32 %v841, 7
        %v843 = vsub.s32 0, %v842
        %v844 = vrot.slane %v839, %v843
        %v845 = vlaneseq
        %v846 = vshrl.u32 %v845, 7
        %v847 = vsub.s32 1, %v846
        %v848 = vrot.slane %v839, %v847
        %v851 = vmul.f32 %v833, %v844
        %v852 = vmul.f32 %v837, %v848
        %v855 = vrot.slane %v851, 4
        %v856 = vrot.slane %v852, 4
        %859 = vst [vmem:[#allocation2 + $0x70] sm:$0xf0] %v855
        %860 = vst [vmem:[#allocation2 + $0x78] sm:$0xf0] %v856
        %861 = vrot.lane.b32.xlu0 %v403, 113
        %v862 = vpop.permute.xlu0 %861
        %863 = vrot.lane.b32.xlu0 %v405, 113
        %v864 = vpop.permute.xlu0 %863
        %vm865 = vcmask 924672
        %v866 = vsel %vm865, %v862, %v864
        %v870 = vsel %vm865, %v864, %v862
        %s871 = scalar_lea.vmem %s7, 32
        %v872 = vld [vmem:[%s871] sm:$0x3]
        %v874 = vlaneseq
        %v875 = vshrl.u32 %v874, 7
        %v876 = vsub.s32 0, %v875
        %v877 = vrot.slane %v872, %v876
        %v878 = vlaneseq
        %v879 = vshrl.u32 %v878, 7
        %v880 = vsub.s32 1, %v879
        %v881 = vrot.slane %v872, %v880
        %v884 = vmul.f32 %v866, %v877
        %v885 = vmul.f32 %v870, %v881
        %886 = vst [vmem:[#allocation2 + $0x80] sm:$0xf] %v884
        %887 = vst [vmem:[#allocation2 + $0x88] sm:$0xf] %v885
        %888 = vrot.lane.b32.xlu0 %v403, 112
        %v889 = vpop.permute.xlu0 %888
        %890 = vrot.lane.b32.xlu0 %v405, 112
        %v891 = vpop.permute.xlu0 %890
        %vm892 = vcmask 916480
        %v893 = vsel %vm892, %v889, %v891
        %v897 = vsel %vm892, %v891, %v889
        %s898 = scalar_lea.vmem %s7, 34
        %v899 = vld [vmem:[%s898] sm:$0x3]
        %v901 = vlaneseq
        %v902 = vshrl.u32 %v901, 7
        %v903 = vsub.s32 0, %v902
        %v904 = vrot.slane %v899, %v903
        %v905 = vlaneseq
        %v906 = vshrl.u32 %v905, 7
        %v907 = vsub.s32 1, %v906
        %v908 = vrot.slane %v899, %v907
        %v911 = vmul.f32 %v893, %v904
        %v912 = vmul.f32 %v897, %v908
        %v915 = vrot.slane %v911, 4
        %v916 = vrot.slane %v912, 4
        %919 = vst [vmem:[#allocation2 + $0x80] sm:$0xf0] %v915
        %920 = vst [vmem:[#allocation2 + $0x88] sm:$0xf0] %v916
        %921 = vrot.lane.b32.xlu0 %v403, 111
        %v922 = vpop.permute.xlu0 %921
        %923 = vrot.lane.b32.xlu0 %v405, 111
        %v924 = vpop.permute.xlu0 %923
        %vm925 = vcmask 908288
        %v926 = vsel %vm925, %v922, %v924
        %v930 = vsel %vm925, %v924, %v922
        %s931 = scalar_lea.vmem %s7, 36
        %v932 = vld [vmem:[%s931] sm:$0x3]
        %v934 = vlaneseq
        %v935 = vshrl.u32 %v934, 7
        %v936 = vsub.s32 0, %v935
        %v937 = vrot.slane %v932, %v936
        %v938 = vlaneseq
        %v939 = vshrl.u32 %v938, 7
        %v940 = vsub.s32 1, %v939
        %v941 = vrot.slane %v932, %v940
        %v944 = vmul.f32 %v926, %v937
        %v945 = vmul.f32 %v930, %v941
        %946 = vst [vmem:[#allocation2 + $0x90] sm:$0xf] %v944
        %947 = vst [vmem:[#allocation2 + $0x98] sm:$0xf] %v945
        %948 = vrot.lane.b32.xlu0 %v403, 110
        %v949 = vpop.permute.xlu0 %948
        %950 = vrot.lane.b32.xlu0 %v405, 110
        %v951 = vpop.permute.xlu0 %950
        %vm952 = vcmask 900096
        %v953 = vsel %vm952, %v949, %v951
        %v957 = vsel %vm952, %v951, %v949
        %s958 = scalar_lea.vmem %s7, 38
        %v959 = vld [vmem:[%s958] sm:$0x3]
        %v961 = vlaneseq
        %v962 = vshrl.u32 %v961, 7
        %v963 = vsub.s32 0, %v962
        %v964 = vrot.slane %v959, %v963
        %v965 = vlaneseq
        %v966 = vshrl.u32 %v965, 7
        %v967 = vsub.s32 1, %v966
        %v968 = vrot.slane %v959, %v967
        %v971 = vmul.f32 %v953, %v964
        %v972 = vmul.f32 %v957, %v968
        %v975 = vrot.slane %v971, 4
        %v976 = vrot.slane %v972, 4
        %979 = vst [vmem:[#allocation2 + $0x90] sm:$0xf0] %v975
        %980 = vst [vmem:[#allocation2 + $0x98] sm:$0xf0] %v976
        %981 = vrot.lane.b32.xlu0 %v403, 98
        %v982 = vpop.permute.xlu0 %981
        %983 = vrot.lane.b32.xlu0 %v405, 98
        %v984 = vpop.permute.xlu0 %983
        %vm985 = vcmask 801792
        %v986 = vsel %vm985, %v982, %v984
        %v990 = vsel %vm985, %v984, %v982
        %s991 = scalar_lea.vmem %s7, 40
        %v992 = vld [vmem:[%s991] sm:$0x3]
        %v994 = vlaneseq
        %v995 = vshrl.u32 %v994, 7
        %v996 = vsub.s32 0, %v995
        %v997 = vrot.slane %v992, %v996
        %v998 = vlaneseq
        %v999 = vshrl.u32 %v998, 7
        %v1000 = vsub.s32 1, %v999
        %v1001 = vrot.slane %v992, %v1000
        %v1004 = vmul.f32 %v986, %v997
        %v1005 = vmul.f32 %v990, %v1001
        %1006 = vst [vmem:[#allocation2 + $0xa0] sm:$0xf] %v1004
        %1007 = vst [vmem:[#allocation2 + $0xa8] sm:$0xf] %v1005
        %1008 = vrot.lane.b32.xlu0 %v403, 97
        %v1009 = vpop.permute.xlu0 %1008
        %1010 = vrot.lane.b32.xlu0 %v405, 97
        %v1011 = vpop.permute.xlu0 %1010
        %vm1012 = vcmask 793600
        %v1013 = vsel %vm1012, %v1009, %v1011
        %v1017 = vsel %vm1012, %v1011, %v1009
        %s1018 = scalar_lea.vmem %s7, 42
        %v1019 = vld [vmem:[%s1018] sm:$0x3]
        %v1021 = vlaneseq
        %v1022 = vshrl.u32 %v1021, 7
        %v1023 = vsub.s32 0, %v1022
        %v1024 = vrot.slane %v1019, %v1023
        %v1025 = vlaneseq
        %v1026 = vshrl.u32 %v1025, 7
        %v1027 = vsub.s32 1, %v1026
        %v1028 = vrot.slane %v1019, %v1027
        %v1031 = vmul.f32 %v1013, %v1024
        %v1032 = vmul.f32 %v1017, %v1028
        %v1035 = vrot.slane %v1031, 4
        %v1036 = vrot.slane %v1032, 4
        %1039 = vst [vmem:[#allocation2 + $0xa0] sm:$0xf0] %v1035
        %1040 = vst [vmem:[#allocation2 + $0xa8] sm:$0xf0] %v1036
        %1041 = vrot.lane.b32.xlu0 %v403, 96
        %v1042 = vpop.permute.xlu0 %1041
        %1043 = vrot.lane.b32.xlu0 %v405, 96
        %v1044 = vpop.permute.xlu0 %1043
        %vm1045 = vcmask 785408
        %v1046 = vsel %vm1045, %v1042, %v1044
        %v1050 = vsel %vm1045, %v1044, %v1042
        %s1051 = scalar_lea.vmem %s7, 44
        %v1052 = vld [vmem:[%s1051] sm:$0x3]
        %v1054 = vlaneseq
        %v1055 = vshrl.u32 %v1054, 7
        %v1056 = vsub.s32 0, %v1055
        %v1057 = vrot.slane %v1052, %v1056
        %v1058 = vlaneseq
        %v1059 = vshrl.u32 %v1058, 7
        %v1060 = vsub.s32 1, %v1059
        %v1061 = vrot.slane %v1052, %v1060
        %v1064 = vmul.f32 %v1046, %v1057
        %v1065 = vmul.f32 %v1050, %v1061
        %1066 = vst [vmem:[#allocation2 + $0xb0] sm:$0xf] %v1064
        %1067 = vst [vmem:[#allocation2 + $0xb8] sm:$0xf] %v1065
        %1068 = vrot.lane.b32.xlu0 %v403, 95
        %v1069 = vpop.permute.xlu0 %1068
        %1070 = vrot.lane.b32.xlu0 %v405, 95
        %v1071 = vpop.permute.xlu0 %1070
        %vm1072 = vcmask 777216
        %v1073 = vsel %vm1072, %v1069, %v1071
        %v1077 = vsel %vm1072, %v1071, %v1069
        %s1078 = scalar_lea.vmem %s7, 46
        %v1079 = vld [vmem:[%s1078] sm:$0x3]
        %v1081 = vlaneseq
        %v1082 = vshrl.u32 %v1081, 7
        %v1083 = vsub.s32 0, %v1082
        %v1084 = vrot.slane %v1079, %v1083
        %v1085 = vlaneseq
        %v1086 = vshrl.u32 %v1085, 7
        %v1087 = vsub.s32 1, %v1086
        %v1088 = vrot.slane %v1079, %v1087
        %v1091 = vmul.f32 %v1073, %v1084
        %v1092 = vmul.f32 %v1077, %v1088
        %v1095 = vrot.slane %v1091, 4
        %v1096 = vrot.slane %v1092, 4
        %1099 = vst [vmem:[#allocation2 + $0xb0] sm:$0xf0] %v1095
        %1100 = vst [vmem:[#allocation2 + $0xb8] sm:$0xf0] %v1096
        %1101 = vrot.lane.b32.xlu0 %v403, 94
        %v1102 = vpop.permute.xlu0 %1101
        %1103 = vrot.lane.b32.xlu0 %v405, 94
        %v1104 = vpop.permute.xlu0 %1103
        %vm1105 = vcmask 769024
        %v1106 = vsel %vm1105, %v1102, %v1104
        %v1110 = vsel %vm1105, %v1104, %v1102
        %s1111 = scalar_lea.vmem %s7, 48
        %v1112 = vld [vmem:[%s1111] sm:$0x3]
        %v1114 = vlaneseq
        %v1115 = vshrl.u32 %v1114, 7
        %v1116 = vsub.s32 0, %v1115
        %v1117 = vrot.slane %v1112, %v1116
        %v1118 = vlaneseq
        %v1119 = vshrl.u32 %v1118, 7
        %v1120 = vsub.s32 1, %v1119
        %v1121 = vrot.slane %v1112, %v1120
        %v1124 = vmul.f32 %v1106, %v1117
        %v1125 = vmul.f32 %v1110, %v1121
        %1126 = vst [vmem:[#allocation2 + $0xc0] sm:$0xf] %v1124
        %1127 = vst [vmem:[#allocation2 + $0xc8] sm:$0xf] %v1125
        %v1128 = vld [vmem:[#allocation2] sm:$0xff]
        %v1129 = vld [vmem:[#allocation2 + $0x8] sm:$0xff]
        %v1130 = vld [vmem:[#allocation2 + $0x10] sm:$0xff]
        %v1131 = vld [vmem:[#allocation2 + $0x18] sm:$0xff]
        %v1132 = vld [vmem:[#allocation2 + $0x20] sm:$0xff]
        %v1133 = vld [vmem:[#allocation2 + $0x28] sm:$0xff]
        %v1134 = vld [vmem:[#allocation2 + $0x30] sm:$0xff]
        %v1135 = vld [vmem:[#allocation2 + $0x38] sm:$0xff]
        %v1136 = vld [vmem:[#allocation2 + $0x40] sm:$0xff]
        %v1137 = vld [vmem:[#allocation2 + $0x48] sm:$0xff]
        %v1138 = vld [vmem:[#allocation2 + $0x50] sm:$0xff]
        %v1139 = vld [vmem:[#allocation2 + $0x58] sm:$0xff]
        %v1140 = vld [vmem:[#allocation2 + $0x60] sm:$0xff]
        %v1141 = vld [vmem:[#allocation2 + $0x68] sm:$0xff]
        %v1142 = vld [vmem:[#allocation2 + $0x70] sm:$0xff]
        %v1143 = vld [vmem:[#allocation2 + $0x78] sm:$0xff]
        %v1144 = vld [vmem:[#allocation2 + $0x80] sm:$0xff]
        %v1145 = vld [vmem:[#allocation2 + $0x88] sm:$0xff]
        %v1146 = vld [vmem:[#allocation2 + $0x90] sm:$0xff]
        %v1147 = vld [vmem:[#allocation2 + $0x98] sm:$0xff]
        %v1148 = vld [vmem:[#allocation2 + $0xa0] sm:$0xff]
        %v1149 = vld [vmem:[#allocation2 + $0xa8] sm:$0xff]
        %v1150 = vld [vmem:[#allocation2 + $0xb0] sm:$0xff]
        %v1151 = vld [vmem:[#allocation2 + $0xb8] sm:$0xff]
        %v1152 = vld [vmem:[#allocation2 + $0xc0] sm:$0xf]
        %v1153 = vld [vmem:[#allocation2 + $0xc8] sm:$0xf]
        %v1154 = vpack.c.bf16 %v1130, %v1128
        %v1155 = vpack.c.bf16 %v1131, %v1129
        %v1156 = vpack.c.bf16 %v1134, %v1132
        %v1157 = vpack.c.bf16 %v1135, %v1133
        %v1158 = vpack.c.bf16 %v1138, %v1136
        %v1159 = vpack.c.bf16 %v1139, %v1137
        %v1160 = vpack.c.bf16 %v1142, %v1140
        %v1161 = vpack.c.bf16 %v1143, %v1141
        %v1162 = vpack.c.bf16 %v1146, %v1144
        %v1163 = vpack.c.bf16 %v1147, %v1145
        %v1164 = vpack.c.bf16 %v1150, %v1148
        %v1165 = vpack.c.bf16 %v1151, %v1149
        %v1166 = vpack.c.bf16 %v1152, %v1152
        %v1167 = vpack.c.bf16 %v1153, %v1153
        %1169 = vset.pattern.permute.xlu0 0
        %1170 = vperm.xlu0 %1169, %v361
        %v1171 = vpop.permute.xlu0 %1170
        %vm1173 = vcmask 818176
        %v1175 = vsel %vm1173, %v359, 0
        %vm1177 = vcmask 1041408
        %v1179 = vsel %vm1177, %v1166, 0
        %v1182 = vsel %vm1177, %v1167, 0
        %1184 = vmatprep.subr.bf16.mxu0 0
        %1185 = vmatpush1.bf16.msra.mxu0 0
        %1186 = vmatprep.subr.bf16.mxu0 %v1182
        %1187 = vmatpush1.bf16.msra.mxu0 %v1179
        %1188 = vmatprep.subr.bf16.mxu0 %v1165
        %1189 = vmatpush1.bf16.msra.mxu0 %v1164
        %1190 = vmatprep.subr.bf16.mxu0 %v1163
        %1191 = vmatpush1.bf16.msra.mxu0 %v1162
        %1192 = vmatprep.subr.bf16.mxu0 %v1161
        %1193 = vmatpush1.bf16.msra.mxu0 %v1160
        %1194 = vmatprep.subr.bf16.mxu0 %v1159
        %1195 = vmatpush1.bf16.msra.mxu0 %v1158
        %1196 = vmatprep.subr.bf16.mxu0 %v1157
        %1197 = vmatpush1.bf16.msra.mxu0 %v1156
        %1198 = vmatprep.subr.bf16.mxu0 %v1155
        %1199 = vmatpush1.bf16.msra.mxu0 %v1154
        %1200 = vmatprep.subr.bf16.mxu0 0
        %1201 = vmatpush2.bf16.msra.mxu0 0
        %1202 = vmatprep.subr.bf16.mxu0 0
        %1203 = vmatpush2.bf16.msra.mxu0 0
        %1204 = vmatprep.subr.bf16.mxu0 0
        %1205 = vmatpush2.bf16.msra.mxu0 0
        %1206 = vmatprep.subr.bf16.mxu0 0
        %1207 = vmatpush2.bf16.msra.mxu0 0
        %1208 = vmatprep.subr.bf16.mxu0 0
        %1209 = vmatpush2.bf16.msra.mxu0 0
        %1210 = vmatprep.subr.bf16.mxu0 0
        %1211 = vmatpush2.bf16.msra.mxu0 0
        %1212 = vmatprep.subr.bf16.mxu0 0
        %1213 = vmatpush2.bf16.msra.mxu0 0
        %1214 = vmatprep.subr.bf16.mxu0 0
        %1215 = vmatpush2.bf16.msra.mxu0 0
        %1216 = vmatprep.mubr.bf16.mxu0 0
        %1217 = vmatmul.mubr.bf16.gmra.mxu0 %v1175
        %v1218 = vpop.f32.mrf.mxu0
        %v1219 = vadd.f32 %v1171, %v1218
        %v1220 = vpop.f32.mrf.mxu0
        %v1221 = vadd.f32 %v1171, %v1220
        %v1222 = vpop.f32.mrf.mxu0
        %v1223 = vpop.f32.mrf.mxu0
        %1224 = vdwg.mxu0
        %v1225 = vmax.f32 %v1219, 0.0
        %v1226 = vmax.f32 %v1221, 0.0
        %1228 = vrot.lane.b32.xlu0 %v1226, 17
        %v1229 = vpop.permute.xlu0 %1228
        %1232 = vrot.lane.b32.xlu0 %v1225, 17
        %v1233 = vpop.permute.xlu0 %1232
        %v1234 = vsel %vm590, %v1233, %v1229
        %v1237 = vsel %vm590, %v1229, %v1233
        %v1238 = vld [vmem:[%s8] sm:$0x3]
        %v1240 = vlaneseq
        %v1241 = vshrl.u32 %v1240, 7
        %v1242 = vsub.s32 0, %v1241
        %v1243 = vrot.slane %v1238, %v1242
        %v1244 = vlaneseq
        %v1245 = vshrl.u32 %v1244, 7
        %v1246 = vsub.s32 1, %v1245
        %v1247 = vrot.slane %v1238, %v1246
        %v1250 = vmul.f32 %v1237, %v1243
        %v1251 = vmul.f32 %v1234, %v1247
        %1252 = vst [vmem:[#allocation3] sm:$0xf] %v1250
        %1253 = vst [vmem:[#allocation3 + $0x8] sm:$0xf] %v1251
        %1254 = vrot.lane.b32.xlu0 %v1226, 16
        %v1255 = vpop.permute.xlu0 %1254
        %1257 = vrot.lane.b32.xlu0 %v1225, 16
        %v1258 = vpop.permute.xlu0 %1257
        %v1259 = vsel %vm617, %v1258, %v1255
        %v1262 = vsel %vm617, %v1255, %v1258
        %s1263 = scalar_lea.vmem %s8, 2
        %v1264 = vld [vmem:[%s1263] sm:$0x3]
        %v1266 = vlaneseq
        %v1267 = vshrl.u32 %v1266, 7
        %v1268 = vsub.s32 0, %v1267
        %v1269 = vrot.slane %v1264, %v1268
        %v1270 = vlaneseq
        %v1271 = vshrl.u32 %v1270, 7
        %v1272 = vsub.s32 1, %v1271
        %v1273 = vrot.slane %v1264, %v1272
        %v1276 = vmul.f32 %v1262, %v1269
        %v1277 = vmul.f32 %v1259, %v1273
        %v1280 = vrot.slane %v1276, 4
        %v1281 = vrot.slane %v1277, 4
        %1284 = vst [vmem:[#allocation3] sm:$0xf0] %v1280
        %1285 = vst [vmem:[#allocation3 + $0x8] sm:$0xf0] %v1281
        %1286 = vrot.lane.b32.xlu0 %v1226, 15
        %v1287 = vpop.permute.xlu0 %1286
        %1289 = vrot.lane.b32.xlu0 %v1225, 15
        %v1290 = vpop.permute.xlu0 %1289
        %v1291 = vsel %vm650, %v1290, %v1287
        %v1294 = vsel %vm650, %v1287, %v1290
        %s1295 = scalar_lea.vmem %s8, 4
        %v1296 = vld [vmem:[%s1295] sm:$0x3]
        %v1298 = vlaneseq
        %v1299 = vshrl.u32 %v1298, 7
        %v1300 = vsub.s32 0, %v1299
        %v1301 = vrot.slane %v1296, %v1300
        %v1302 = vlaneseq
        %v1303 = vshrl.u32 %v1302, 7
        %v1304 = vsub.s32 1, %v1303
        %v1305 = vrot.slane %v1296, %v1304
        %v1308 = vmul.f32 %v1294, %v1301
        %v1309 = vmul.f32 %v1291, %v1305
        %1310 = vst [vmem:[#allocation3 + $0x10] sm:$0xf] %v1308
        %1311 = vst [vmem:[#allocation3 + $0x18] sm:$0xf] %v1309
        %1312 = vrot.lane.b32.xlu0 %v1226, 1
        %v1313 = vpop.permute.xlu0 %1312
        %1315 = vrot.lane.b32.xlu0 %v1225, 1
        %v1316 = vpop.permute.xlu0 %1315
        %v1317 = vsel %vm737, %v1316, %v1313
        %v1320 = vsel %vm737, %v1313, %v1316
        %s1321 = scalar_lea.vmem %s8, 6
        %v1322 = vld [vmem:[%s1321] sm:$0x3]
        %v1324 = vlaneseq
        %v1325 = vshrl.u32 %v1324, 7
        %v1326 = vsub.s32 0, %v1325
        %v1327 = vrot.slane %v1322, %v1326
        %v1328 = vlaneseq
        %v1329 = vshrl.u32 %v1328, 7
        %v1330 = vsub.s32 1, %v1329
        %v1331 = vrot.slane %v1322, %v1330
        %v1334 = vmul.f32 %v1320, %v1327
        %v1335 = vmul.f32 %v1317, %v1331
        %v1338 = vrot.slane %v1334, 4
        %v1339 = vrot.slane %v1335, 4
        %1342 = vst [vmem:[#allocation3 + $0x10] sm:$0xf0] %v1338
        %1343 = vst [vmem:[#allocation3 + $0x18] sm:$0xf0] %v1339
        %1344 = vst [vmem:[#allocation3 + $0x20] sm:$0xf] %v1225
        %1345 = vst [vmem:[#allocation3 + $0x28] sm:$0xf] %v1226
        %1346 = vrot.lane.b32.xlu0 %v1225, 127
        %v1347 = vpop.permute.xlu0 %1346
        %1348 = vrot.lane.b32.xlu0 %v1226, 127
        %v1349 = vpop.permute.xlu0 %1348
        %v1350 = vsel %vm772, %v1347, %v1349
        %v1354 = vsel %vm772, %v1349, %v1347
        %s1355 = scalar_lea.vmem %s8, 10
        %v1356 = vld [vmem:[%s1355] sm:$0x3]
        %v1358 = vlaneseq
        %v1359 = vshrl.u32 %v1358, 7
        %v1360 = vsub.s32 0, %v1359
        %v1361 = vrot.slane %v1356, %v1360
        %v1362 = vlaneseq
        %v1363 = vshrl.u32 %v1362, 7
        %v1364 = vsub.s32 1, %v1363
        %v1365 = vrot.slane %v1356, %v1364
        %v1368 = vmul.f32 %v1350, %v1361
        %v1369 = vmul.f32 %v1354, %v1365
        %v1372 = vrot.slane %v1368, 4
        %v1373 = vrot.slane %v1369, 4
        %1376 = vst [vmem:[#allocation3 + $0x20] sm:$0xf0] %v1372
        %1377 = vst [vmem:[#allocation3 + $0x28] sm:$0xf0] %v1373
        %1378 = vrot.lane.b32.xlu0 %v1225, 113
        %v1379 = vpop.permute.xlu0 %1378
        %1380 = vrot.lane.b32.xlu0 %v1226, 113
        %v1381 = vpop.permute.xlu0 %1380
        %v1382 = vsel %vm865, %v1379, %v1381
        %v1386 = vsel %vm865, %v1381, %v1379
        %s1387 = scalar_lea.vmem %s8, 12
        %v1388 = vld [vmem:[%s1387] sm:$0x3]
        %v1390 = vlaneseq
        %v1391 = vshrl.u32 %v1390, 7
        %v1392 = vsub.s32 0, %v1391
        %v1393 = vrot.slane %v1388, %v1392
        %v1394 = vlaneseq
        %v1395 = vshrl.u32 %v1394, 7
        %v1396 = vsub.s32 1, %v1395
        %v1397 = vrot.slane %v1388, %v1396
        %v1400 = vmul.f32 %v1382, %v1393
        %v1401 = vmul.f32 %v1386, %v1397
        %1402 = vst [vmem:[#allocation3 + $0x30] sm:$0xf] %v1400
        %1403 = vst [vmem:[#allocation3 + $0x38] sm:$0xf] %v1401
        %1404 = vrot.lane.b32.xlu0 %v1225, 112
        %v1405 = vpop.permute.xlu0 %1404
        %1406 = vrot.lane.b32.xlu0 %v1226, 112
        %v1407 = vpop.permute.xlu0 %1406
        %v1408 = vsel %vm892, %v1405, %v1407
        %v1412 = vsel %vm892, %v1407, %v1405
        %s1413 = scalar_lea.vmem %s8, 14
        %v1414 = vld [vmem:[%s1413] sm:$0x3]
        %v1416 = vlaneseq
        %v1417 = vshrl.u32 %v1416, 7
        %v1418 = vsub.s32 0, %v1417
        %v1419 = vrot.slane %v1414, %v1418
        %v1420 = vlaneseq
        %v1421 = vshrl.u32 %v1420, 7
        %v1422 = vsub.s32 1, %v1421
        %v1423 = vrot.slane %v1414, %v1422
        %v1426 = vmul.f32 %v1408, %v1419
        %v1427 = vmul.f32 %v1412, %v1423
        %v1430 = vrot.slane %v1426, 4
        %v1431 = vrot.slane %v1427, 4
        %1434 = vst [vmem:[#allocation3 + $0x30] sm:$0xf0] %v1430
        %1435 = vst [vmem:[#allocation3 + $0x38] sm:$0xf0] %v1431
        %1436 = vrot.lane.b32.xlu0 %v1225, 111
        %v1437 = vpop.permute.xlu0 %1436
        %1438 = vrot.lane.b32.xlu0 %v1226, 111
        %v1439 = vpop.permute.xlu0 %1438
        %v1440 = vsel %vm925, %v1437, %v1439
        %v1444 = vsel %vm925, %v1439, %v1437
        %s1445 = scalar_lea.vmem %s8, 16
        %v1446 = vld [vmem:[%s1445] sm:$0x3]
        %v1448 = vlaneseq
        %v1449 = vshrl.u32 %v1448, 7
        %v1450 = vsub.s32 0, %v1449
        %v1451 = vrot.slane %v1446, %v1450
        %v1452 = vlaneseq
        %v1453 = vshrl.u32 %v1452, 7
        %v1454 = vsub.s32 1, %v1453
        %v1455 = vrot.slane %v1446, %v1454
        %v1458 = vmul.f32 %v1440, %v1451
        %v1459 = vmul.f32 %v1444, %v1455
        %1460 = vst [vmem:[#allocation3 + $0x40] sm:$0xf] %v1458
        %1461 = vst [vmem:[#allocation3 + $0x48] sm:$0xf] %v1459
        %v1462 = vld [vmem:[#allocation3] sm:$0xff]
        %v1463 = vld [vmem:[#allocation3 + $0x8] sm:$0xff]
        %v1464 = vld [vmem:[#allocation3 + $0x10] sm:$0xff]
        %v1465 = vld [vmem:[#allocation3 + $0x18] sm:$0xff]
        %v1466 = vld [vmem:[#allocation3 + $0x20] sm:$0xff]
        %v1467 = vld [vmem:[#allocation3 + $0x28] sm:$0xff]
        %v1468 = vld [vmem:[#allocation3 + $0x30] sm:$0xff]
        %v1469 = vld [vmem:[#allocation3 + $0x38] sm:$0xff]
        %v1470 = vld [vmem:[#allocation3 + $0x40] sm:$0xf]
        %v1471 = vld [vmem:[#allocation3 + $0x48] sm:$0xf]
        %v1472 = vpack.c.bf16 %v1464, %v1462
        %v1473 = vpack.c.bf16 %v1465, %v1463
        %v1474 = vpack.c.bf16 %v1468, %v1466
        %v1475 = vpack.c.bf16 %v1469, %v1467
        %v1476 = vpack.c.bf16 %v1470, %v1470
        %v1477 = vpack.c.bf16 %v1471, %v1471
        %1479 = vset.pattern.permute.xlu0 0
        %1480 = vperm.xlu0 %1479, %v362
        %v1481 = vpop.permute.xlu0 %1480
        %vm1483 = vcmask 293888
        %v1485 = vsel %vm1483, %v360, 0
        %v1488 = vsel %vm1177, %v1476, 0
        %v1491 = vsel %vm1177, %v1477, 0
        %1493 = vmatprep.subr.bf16.mxu0 0
        %1494 = vmatpush1.bf16.msra.mxu0 0
        %1495 = vmatprep.subr.bf16.mxu0 0
        %1496 = vmatpush1.bf16.msra.mxu0 0
        %1497 = vmatprep.subr.bf16.mxu0 0
        %1498 = vmatpush1.bf16.msra.mxu0 0
        %1499 = vmatprep.subr.bf16.mxu0 0
        %1500 = vmatpush1.bf16.msra.mxu0 0
        %1501 = vmatprep.subr.bf16.mxu0 0
        %1502 = vmatpush1.bf16.msra.mxu0 0
        %1503 = vmatprep.subr.bf16.mxu0 %v1491
        %1504 = vmatpush1.bf16.msra.mxu0 %v1488
        %1505 = vmatprep.subr.bf16.mxu0 %v1475
        %1506 = vmatpush1.bf16.msra.mxu0 %v1474
        %1507 = vmatprep.subr.bf16.mxu0 %v1473
        %1508 = vmatpush1.bf16.msra.mxu0 %v1472
        %1509 = vmatprep.subr.bf16.mxu0 0
        %1510 = vmatpush2.bf16.msra.mxu0 0
        %1511 = vmatprep.subr.bf16.mxu0 0
        %1512 = vmatpush2.bf16.msra.mxu0 0
        %1513 = vmatprep.subr.bf16.mxu0 0
        %1514 = vmatpush2.bf16.msra.mxu0 0
        %1515 = vmatprep.subr.bf16.mxu0 0
        %1516 = vmatpush2.bf16.msra.mxu0 0
        %1517 = vmatprep.subr.bf16.mxu0 0
        %1518 = vmatpush2.bf16.msra.mxu0 0
        %1519 = vmatprep.subr.bf16.mxu0 0
        %1520 = vmatpush2.bf16.msra.mxu0 0
        %1521 = vmatprep.subr.bf16.mxu0 0
        %1522 = vmatpush2.bf16.msra.mxu0 0
        %1523 = vmatprep.subr.bf16.mxu0 0
        %1524 = vmatpush2.bf16.msra.mxu0 0
        %1525 = vmatprep.mubr.bf16.mxu0 0
        %1526 = vmatmul.mubr.bf16.gmra.mxu0 %v1485
        %v1527 = vpop.f32.mrf.mxu0
        %v1528 = vadd.f32 %v1481, %v1527
        %v1529 = vpop.f32.mrf.mxu0
        %v1530 = vadd.f32 %v1481, %v1529
        %v1531 = vpop.f32.mrf.mxu0
        %v1532 = vpop.f32.mrf.mxu0
        %1533 = vdwg.mxu0
        %v1534 = vmax.f32 %v1528, 0.0
        %v1535 = vmax.f32 %v1530, 0.0
        %v1536 = vpack.c.bf16 %v1534, %v1534
        %v1537 = vpack.c.bf16 %v1535, %v1535
        %v1570 = vunpack.c.l.b16 %v363
        %v1571 = vunpack.c.l.b16 %v364
        %v1572 = vunpack.c.l.b16 %v365
        %v1573 = vunpack.c.l.b16 %v366
        %v1574 = vunpack.c.l.b16 %v367
        %v1575 = vunpack.c.l.b16 %v368
        %v1576 = vunpack.c.l.b16 %v369
        %v1577 = vunpack.c.l.b16 %v370
        %v1578 = vunpack.c.l.b16 %v371
        %v1579 = vunpack.c.l.b16 %v372
        %v1580 = vunpack.c.l.b16 %v373
        %v1581 = vunpack.c.l.b16 %v374
        %v1582 = vunpack.c.l.b16 %v375
        %v1583 = vunpack.c.l.b16 %v376
        %v1584 = vunpack.c.l.b16 %v377
        %v1585 = vunpack.c.l.b16 %v378
        %v1586 = vunpack.c.l.b16 %v379
        %v1587 = vunpack.c.l.b16 %v380
        %v1588 = vunpack.c.l.b16 %v381
        %v1589 = vunpack.c.l.b16 %v382
        %v1590 = vunpack.c.l.b16 %v383
        %v1591 = vunpack.c.l.b16 %v384
        %v1592 = vunpack.c.l.b16 %v385
        %v1593 = vunpack.c.l.b16 %v386
        %v1594 = vunpack.c.l.b16 %v387
        %v1595 = vunpack.c.l.b16 %v388
        %v1596 = vunpack.c.l.b16 %v389
        %v1597 = vunpack.c.l.b16 %v390
        %v1598 = vunpack.c.l.b16 %v391
        %v1599 = vunpack.c.l.b16 %v392
        %v1600 = vunpack.c.l.b16 %v393
        %v1601 = vunpack.c.l.b16 %v394
        %v1602 = vpack.c.b16 %v1571, %v1570
        %v1603 = vpack.c.b16 %v1573, %v1572
        %v1604 = vpack.c.b16 %v1575, %v1574
        %v1605 = vpack.c.b16 %v1577, %v1576
        %v1606 = vpack.c.b16 %v1579, %v1578
        %v1607 = vpack.c.b16 %v1581, %v1580
        %v1608 = vpack.c.b16 %v1583, %v1582
        %v1609 = vpack.c.b16 %v1585, %v1584
        %v1610 = vpack.c.b16 %v1587, %v1586
        %v1611 = vpack.c.b16 %v1589, %v1588
        %v1612 = vpack.c.b16 %v1591, %v1590
        %v1613 = vpack.c.b16 %v1593, %v1592
        %v1614 = vpack.c.b16 %v1595, %v1594
        %v1615 = vpack.c.b16 %v1597, %v1596
        %v1616 = vpack.c.b16 %v1599, %v1598
        %v1617 = vpack.c.b16 %v1601, %v1600
        %1634 = vmatprep.subr.bf16.mxu0 0
        %1635 = vmatpush1.bf16.msra.mxu0 %v1609
        %1636 = vmatprep.subr.bf16.mxu0 0
        %1637 = vmatpush1.bf16.msra.mxu0 %v1608
        %1638 = vmatprep.subr.bf16.mxu0 0
        %1639 = vmatpush1.bf16.msra.mxu0 %v1607
        %1640 = vmatprep.subr.bf16.mxu0 0
        %1641 = vmatpush1.bf16.msra.mxu0 %v1606
        %1642 = vmatprep.subr.bf16.mxu0 0
        %1643 = vmatpush1.bf16.msra.mxu0 %v1605
        %1644 = vmatprep.subr.bf16.mxu0 0
        %1645 = vmatpush1.bf16.msra.mxu0 %v1604
        %1646 = vmatprep.subr.bf16.mxu0 0
        %1647 = vmatpush1.bf16.msra.mxu0 %v1603
        %1648 = vmatprep.subr.bf16.mxu0 0
        %1649 = vmatpush1.bf16.msra.mxu0 %v1602
        %1650 = vmatprep.subr.bf16.mxu0 0
        %1651 = vmatpush2.bf16.msra.mxu0 %v1617
        %1652 = vmatprep.subr.bf16.mxu0 0
        %1653 = vmatpush2.bf16.msra.mxu0 %v1616
        %1654 = vmatprep.subr.bf16.mxu0 0
        %1655 = vmatpush2.bf16.msra.mxu0 %v1615
        %1656 = vmatprep.subr.bf16.mxu0 0
        %1657 = vmatpush2.bf16.msra.mxu0 %v1614
        %1658 = vmatprep.subr.bf16.mxu0 0
        %1659 = vmatpush2.bf16.msra.mxu0 %v1613
        %1660 = vmatprep.subr.bf16.mxu0 0
        %1661 = vmatpush2.bf16.msra.mxu0 %v1612
        %1662 = vmatprep.subr.bf16.mxu0 0
        %1663 = vmatpush2.bf16.msra.mxu0 %v1611
        %1664 = vmatprep.subr.bf16.mxu0 0
        %1665 = vmatpush2.bf16.msra.mxu0 %v1610
        %1666 = vmatprep.mubr.bf16.mxu0 %v1537
        %1667 = vmatmul.mubr.bf16.gmra.mxu0 %v1536
        %v1668 = vpop.f32.mrf.mxu0
        %v1669 = vadd.f32 0.0, %v1668
        %v1670 = vpop.f32.mrf.mxu0
        %v1671 = vpop.f32.mrf.mxu0
        %v1672 = vpop.f32.mrf.mxu0
        %1673 = vdwg.mxu0
        %1675 = vrot.lane.b32.xlu0 %v1669, 73
        %v1676 = vpop.permute.xlu0 %1675
        %1678 = vrot.lane.b32.xlu0 %v1669, 9
        %v1679 = vpop.permute.xlu0 %1678
        %vm1681 = vcmask 72704
        %v1682 = vsel %vm1681, %v1676, %v1679
        %v1683 = vld [vmem:[%s9] sm:$0x1]
        %v1685 = vlaneseq
        %v1686 = vshrl.u32 %v1685, 7
        %v1687 = vsub.s32 0, %v1686
        %v1688 = vrot.slane %v1683, %v1687
        %v1690 = vmul.f32 %v1682, %v1688
        %v1691 = vmax.f32 %v1669, %v1690
        %1692 = vrot.lane.b32.xlu0 %v1669, 72
        %v1693 = vpop.permute.xlu0 %1692
        %1695 = vrot.lane.b32.xlu0 %v1669, 8
        %v1696 = vpop.permute.xlu0 %1695
        %vm1698 = vcmask 64512
        %v1699 = vsel %vm1698, %v1693, %v1696
        %s1700 = scalar_lea.vmem %s9, 1
        %v1701 = vld [vmem:[%s1700] sm:$0x1]
        %v1703 = vlaneseq
        %v1704 = vshrl.u32 %v1703, 7
        %v1705 = vsub.s32 0, %v1704
        %v1706 = vrot.slane %v1701, %v1705
        %v1708 = vmul.f32 %v1699, %v1706
        %v1709 = vmax.f32 %v1691, %v1708
        %1710 = vrot.lane.b32.xlu0 %v1669, 71
        %v1711 = vpop.permute.xlu0 %1710
        %1713 = vrot.lane.b32.xlu0 %v1669, 7
        %v1714 = vpop.permute.xlu0 %1713
        %vm1716 = vcmask 56320
        %v1717 = vsel %vm1716, %v1711, %v1714
        %s1718 = scalar_lea.vmem %s9, 2
        %v1719 = vld [vmem:[%s1718] sm:$0x1]
        %v1721 = vlaneseq
        %v1722 = vshrl.u32 %v1721, 7
        %v1723 = vsub.s32 0, %v1722
        %v1724 = vrot.slane %v1719, %v1723
        %v1726 = vmul.f32 %v1717, %v1724
        %v1727 = vmax.f32 %v1709, %v1726
        %1728 = vrot.lane.b32.xlu0 %v1669, 65
        %v1729 = vpop.permute.xlu0 %1728
        %1731 = vrot.lane.b32.xlu0 %v1669, 1
        %v1732 = vpop.permute.xlu0 %1731
        %v1734 = vsel %vm737, %v1729, %v1732
        %s1735 = scalar_lea.vmem %s9, 3
        %v1736 = vld [vmem:[%s1735] sm:$0x1]
        %v1738 = vlaneseq
        %v1739 = vshrl.u32 %v1738, 7
        %v1740 = vsub.s32 0, %v1739
        %v1741 = vrot.slane %v1736, %v1740
        %v1743 = vmul.f32 %v1734, %v1741
        %v1744 = vmax.f32 %v1727, %v1743
        %1745 = vrot.lane.b32.xlu0 %v1669, 127
        %v1746 = vpop.permute.xlu0 %1745
        %1748 = vrot.lane.b32.xlu0 %v1669, 63
        %v1749 = vpop.permute.xlu0 %1748
        %vm1751 = vcmask 515072
        %v1752 = vsel %vm1751, %v1746, %v1749
        %s1753 = scalar_lea.vmem %s9, 5
        %v1754 = vld [vmem:[%s1753] sm:$0x1]
        %v1756 = vlaneseq
        %v1757 = vshrl.u32 %v1756, 7
        %v1758 = vsub.s32 0, %v1757
        %v1759 = vrot.slane %v1754, %v1758
        %v1761 = vmul.f32 %v1752, %v1759
        %v1762 = vmax.f32 %v1744, %v1761
        %1763 = vrot.lane.b32.xlu0 %v1669, 121
        %v1764 = vpop.permute.xlu0 %1763
        %1766 = vrot.lane.b32.xlu0 %v1669, 57
        %v1767 = vpop.permute.xlu0 %1766
        %vm1769 = vcmask 465920
        %v1770 = vsel %vm1769, %v1764, %v1767
        %s1771 = scalar_lea.vmem %s9, 6
        %v1772 = vld [vmem:[%s1771] sm:$0x1]
        %v1774 = vlaneseq
        %v1775 = vshrl.u32 %v1774, 7
        %v1776 = vsub.s32 0, %v1775
        %v1777 = vrot.slane %v1772, %v1776
        %v1779 = vmul.f32 %v1770, %v1777
        %v1780 = vmax.f32 %v1762, %v1779
        %1781 = vrot.lane.b32.xlu0 %v1669, 120
        %v1782 = vpop.permute.xlu0 %1781
        %1784 = vrot.lane.b32.xlu0 %v1669, 56
        %v1785 = vpop.permute.xlu0 %1784
        %vm1787 = vcmask 457728
        %v1788 = vsel %vm1787, %v1782, %v1785
        %s1789 = scalar_lea.vmem %s9, 7
        %v1790 = vld [vmem:[%s1789] sm:$0x1]
        %v1792 = vlaneseq
        %v1793 = vshrl.u32 %v1792, 7
        %v1794 = vsub.s32 0, %v1793
        %v1795 = vrot.slane %v1790, %v1794
        %v1797 = vmul.f32 %v1788, %v1795
        %v1798 = vmax.f32 %v1780, %v1797
        %1799 = vrot.lane.b32.xlu0 %v1669, 119
        %v1800 = vpop.permute.xlu0 %1799
        %1802 = vrot.lane.b32.xlu0 %v1669, 55
        %v1803 = vpop.permute.xlu0 %1802
        %vm1805 = vcmask 449536
        %v1806 = vsel %vm1805, %v1800, %v1803
        %s1807 = scalar_lea.vmem %s9, 8
        %v1808 = vld [vmem:[%s1807] sm:$0x1]
        %v1810 = vlaneseq
        %v1811 = vshrl.u32 %v1810, 7
        %v1812 = vsub.s32 0, %v1811
        %v1813 = vrot.slane %v1808, %v1812
        %v1815 = vmul.f32 %v1806, %v1813
        %v1816 = vmax.f32 %v1798, %v1815
        %v1817 = vpack.c.bf16 %v1816, %v1816
        %v1826 = vunpack.c.l.b16 %v395
        %v1827 = vunpack.c.l.b16 %v396
        %v1828 = vunpack.c.l.b16 %v397
        %v1829 = vunpack.c.l.b16 %v398
        %v1830 = vunpack.c.l.b16 %v399
        %v1831 = vunpack.c.l.b16 %v400
        %v1832 = vunpack.c.l.b16 %v401
        %v1833 = vunpack.c.l.b16 %v402
        %v1834 = vpack.c.b16 %v1827, %v1826
        %v1835 = vpack.c.b16 %v1829, %v1828
        %v1836 = vpack.c.b16 %v1831, %v1830
        %v1837 = vpack.c.b16 %v1833, %v1832
        %vm1842 = vcmask 523264
        %v1844 = vsel %vm1842, %v1817, 0
        %1846 = vmatprep.subr.bf16.mxu0 0
        %1847 = vmatpush1.bf16.msra.mxu0 0
        %1848 = vmatprep.subr.bf16.mxu0 0
        %1849 = vmatpush1.bf16.msra.mxu0 0
        %1850 = vmatprep.subr.bf16.mxu0 0
        %1851 = vmatpush1.bf16.msra.mxu0 0
        %1852 = vmatprep.subr.bf16.mxu0 0
        %1853 = vmatpush1.bf16.msra.mxu0 0
        %1854 = vmatprep.subr.bf16.mxu0 0
        %1855 = vmatpush1.bf16.msra.mxu0 %v1837
        %1856 = vmatprep.subr.bf16.mxu0 0
        %1857 = vmatpush1.bf16.msra.mxu0 %v1836
        %1858 = vmatprep.subr.bf16.mxu0 0
        %1859 = vmatpush1.bf16.msra.mxu0 %v1835
        %1860 = vmatprep.subr.bf16.mxu0 0
        %1861 = vmatpush1.bf16.msra.mxu0 %v1834
        %1862 = vmatprep.subr.bf16.mxu0 0
        %1863 = vmatpush2.bf16.msra.mxu0 0
        %1864 = vmatprep.subr.bf16.mxu0 0
        %1865 = vmatpush2.bf16.msra.mxu0 0
        %1866 = vmatprep.subr.bf16.mxu0 0
        %1867 = vmatpush2.bf16.msra.mxu0 0
        %1868 = vmatprep.subr.bf16.mxu0 0
        %1869 = vmatpush2.bf16.msra.mxu0 0
        %1870 = vmatprep.subr.bf16.mxu0 0
        %1871 = vmatpush2.bf16.msra.mxu0 0
        %1872 = vmatprep.subr.bf16.mxu0 0
        %1873 = vmatpush2.bf16.msra.mxu0 0
        %1874 = vmatprep.subr.bf16.mxu0 0
        %1875 = vmatpush2.bf16.msra.mxu0 0
        %1876 = vmatprep.subr.bf16.mxu0 0
        %1877 = vmatpush2.bf16.msra.mxu0 0
        %1878 = vmatprep.mubr.bf16.mxu0 0
        %1879 = vmatmul.mubr.bf16.gmra.mxu0 %v1844
        %v1880 = vpop.f32.mrf.mxu0
        %v1881 = vadd.f32 0.0, %v1880
        %v1882 = vpop.f32.mrf.mxu0
        %v1883 = vpop.f32.mrf.mxu0
        %v1884 = vpop.f32.mrf.mxu0
        %1885 = vdwg.mxu0
        %1886 = vst.msk [vmem:[%s352] sm:$0xff] %vm617, %v1881
        %s1887 = sand.u32 %s247, 1
        %s1888 = scalar_lea.sflag [#allocation5], %s1887
        %s1889 = sand.u32 %s247, 1
        %s1890 = smul.addr %s1889, 8
        %s1891 = scalar_lea.vmem [#allocation4], %s1890
        // Predicated region
        $region61: #{tpu_custom_call.1} parent=59 // pred_check
          %p1892 = pneg %p257
        $region62: #{tpu_custom_call.1} parent=59 // pred_check_branch
          %1894 = sbr.rel (%p1892) target = $region64
        $region63: #{tpu_custom_call.1} parent=59 // pred_region
          %s1896 = ssub.s32 128, 128
          %1897 = vsyncadd %s1888, %s1896
          %s1898 = smul.addr %s24, 128
          %s1899 = scalar_lea.hbm %s10, %s1898
          %s1901 = sshll.u32 %s1891, 4
          %s1902 = int_to_ptr.vmem [resolvable:$true] %s1901
          %1904 = dma.vmem_to_hbm [thread:$0]  %s1902, 128, %s1899, %s1888
        $region64: #{tpu_custom_call.1} parent=59 // pred_fallthru
          _
      $region60: #{tpu_custom_call.1} parent=5 // pred_fallthru
        _
      %p1905 = scmp.le.s32.totalorder 2, %s19
      // Predicated region
      $region65: #{tpu_custom_call.1} parent=5 // pred_check
        %p1906 = pneg %p1905
      $region66: #{tpu_custom_call.1} parent=5 // pred_check_branch
        %1908 = sbr.rel (%p1906) target = $region68
      $region67: #{tpu_custom_call.1} parent=5 // pred_region
        %s1909 = ssub.s32 %s19, 2
        // Predicated region
        $region69: #{tpu_custom_call.1} parent=67 // pred_check
          %p1910 = pneg %p263
        $region70: #{tpu_custom_call.1} parent=67 // pred_check_branch
          %1912 = sbr.rel (%p1910) target = $region72
        $region71: #{tpu_custom_call.1} parent=67 // pred_region
          %s1913 = sand.u32 %s248, 1
          %s1914 = scalar_lea.sflag [#allocation5], %s1913
          %s1915 = sand.u32 %s248, 1
          %s1916 = smul.addr %s1915, 8
          %s1917 = scalar_lea.vmem [#allocation4], %s1916
          %1918 = dma.done %s1914, 128
        $region72: #{tpu_custom_call.1} parent=67 // pred_fallthru
          _
      $region68: #{tpu_custom_call.1} parent=5 // pred_fallthru
        _
    $region6: #{tpu_custom_call.1} parent=1 // loop_footer
      %s23 = sadd.s32 1, %s19
    $region7: #{tpu_custom_call.1} parent=1 // loop_footer_branch
      %18 = sbr.rel target = $region3
    $region8: #{tpu_custom_call.1} parent=1 // loop_exit
      _
    %1919 = vsyncpa [#allocation5], 1
    %s1920 = scalar_lea.sflag [#allocation5], 1
    %1921 = vsyncpa %s1920, 1

</llo_original>
